<compile_context>
chip_gen: v5e
topology: v5e:2x2
jax: 0.10.0
libtpu: 0.0.40
codegen_flags: <defaults>
</compile_context>

<pallas_src>
import jax
import jax.numpy as jnp
from jax import lax
from jax.experimental import pallas as pl
from jax.experimental.pallas import tpu as pltpu

L, D, K = 500, 128, 1      # as in the PyTorch module
LP = 512                   # L padded to a lane multiple
P1W = 128                  # pooled-1 feature width: 4 positions * 20 ch -> 128
P2W = 512                  # pooled-2 feature width: 9 positions * 50 ch -> 512
NG = 4                     # max #conv positions feeding one pooled position

# conv1 3x3 output positions (s = oi*3+oj) feeding each 2x2 pooled-1 position
_POOL1 = ((0,), (1, 2), (3, 6), (4, 5, 7, 8))
# conv2 4x4 output positions (pos = oi*4+oj) feeding each 3x3 pooled-2 position
_POOL2 = ((0,), (1, 2), (3,), (4, 8), (5, 6, 9, 10), (7, 11),
          (12,), (13, 14), (15,))


# ----------------------------------------------------------------------------
# Pallas kernel: full forward pass for one bag of N instances (one grid step).
# ----------------------------------------------------------------------------
def _attention_mil_kernel(x_ref, w1_ref, b1_ref, w2_ref, b2_ref,
                          wfe2_ref, bfe2_ref, wa1_ref, ba1_ref,
                          wa2_ref, ba2_ref, wc_ref, bc_ref, out_ref):
    f32 = jnp.float32
    mx = jnp.maximum
    X = x_ref[...]                              # (N, z_dim) f32
    N = X.shape[0]
    OUT_W = out_ref.shape[-1]
    mdt = w1_ref.dtype                          # MXU operand dtype (bf16/f32)

    # ---- feature_extractor_part1, stage 1: conv1 (9 positions fused, columns
    #      grouped by max-pool partner) -> ReLU -> MaxPool as full-vreg max ----
    c1 = mx(jnp.dot(X.astype(mdt), w1_ref[...], preferred_element_type=f32)
            + b1_ref[...], 0.0)                               # (N, 4*128)
    p1 = mx(mx(c1[:, 0 * P1W:1 * P1W], c1[:, 1 * P1W:2 * P1W]),
            mx(c1[:, 2 * P1W:3 * P1W], c1[:, 3 * P1W:4 * P1W]))   # (N, 128)

    # ---- stage 2: conv2 (16 positions fused, pool-partner-grouped) -> ReLU
    #      -> MaxPool as full-vreg max.  Pooled lane layout: s2*50 + ch. ------
    c2 = mx(jnp.dot(p1.astype(mdt), w2_ref[...], preferred_element_type=f32)
            + b2_ref[...], 0.0)                               # (N, 4*512)
    pooled = mx(mx(c2[:, 0 * P2W:1 * P2W], c2[:, 1 * P2W:2 * P2W]),
                mx(c2[:, 2 * P2W:3 * P2W], c2[:, 3 * P2W:4 * P2W]))  # (N, 512)

    # ---- feature_extractor_part2: Linear(450, 500) + ReLU (padded 512x512) --
    H = mx(jnp.dot(pooled.astype(mdt), wfe2_ref[...],
                   preferred_element_type=f32) + bfe2_ref[...], 0.0)  # (N, 512)

    # ---- attention: Linear(500, 128) -> tanh -> Linear(128, 1) --------------
    a_hid = jnp.tanh(jnp.dot(H.astype(mdt), wa1_ref[...],
                             preferred_element_type=f32) + ba1_ref[...])
    # 1-column linear as VPU multiply + lane reduce (no MXU push/drain).
    a_logit = jnp.sum(a_hid * wa2_ref[...], axis=1, keepdims=True) + ba2_ref[...]

    # softmax over the instance axis (== F.softmax(A.T, dim=1))
    a_max = jnp.max(a_logit, axis=0, keepdims=True)
    a_exp = jnp.exp(a_logit - a_max)
    a_w = a_exp / jnp.sum(a_exp, axis=0, keepdims=True)        # (N, 1)

    # M = A @ H : attention-weighted sum over instances (padded cols stay 0).
    M = jnp.sum(a_w * H, axis=0, keepdims=True)                # (1, 512)

    # ---- classifier: Linear(500, 1) + Sigmoid as VPU lane reduce ------------
    logit = jnp.sum(M * wc_ref[...], axis=1, keepdims=True) + bc_ref[...]
    y_prob = 1.0 / (1.0 + jnp.exp(-logit))                     # (1, 1)

    # ---- single lane-dense packed row: [y_prob, a_0 .. a_{N-1}, 0 ...] ------
    # Column->row transpose of a_w via iota mask + sublane reduce (cheap at
    # small N; switch to an XLU transpose if bags grow past ~128 instances).
    row = lax.broadcasted_iota(jnp.int32, (N, OUT_W), 0)
    col = lax.broadcasted_iota(jnp.int32, (N, OUT_W), 1)
    a_row = jnp.sum(jnp.where(col == row + 1, a_w, 0.0),
                    axis=0, keepdims=True)                     # (1, OUT_W)
    col0 = lax.broadcasted_iota(jnp.int32, (1, OUT_W), 1)
    packed = jnp.where(col0 == 0, y_prob, a_row)               # (1, OUT_W)
    out_ref[...] = jnp.broadcast_to(packed, out_ref.shape)     # full-tile store


# ----------------------------------------------------------------------------
# One-time parameter packing (hoisted out of the per-forward hot path)
# ----------------------------------------------------------------------------
def pack_params(params, *, mxu_dtype=jnp.bfloat16):
    """Re-layout PyTorch-shaped parameters into lane-aligned, MXU-ready
    matrices.  Call once per parameter set; pass the result to the forward."""
    (w1, b1, w2, b2, wfe2, bfe2, wa1, ba1, wa2, ba2, wc, bc) = params
    f32 = jnp.float32
    z_dim = w1.shape[1]

    # --- conv1 fused: output position s = oi*3+oj of the 3x3 map sees kernel
    #     tap (2-oi, 2-oj).  Column layout g*128 + p*20 + ch (g = pool-partner
    #     group, p = pooled-1 position); unused slots have zero weight AND zero
    #     bias so ReLU(0)=0 never wins the max against ReLU outputs (>= 0).
    w1pos = jnp.transpose(w1[:, :, ::-1, ::-1], (2, 3, 1, 0)).reshape(9, z_dim, 20)
    w1a = jnp.zeros((z_dim, NG * P1W), f32)
    b1a = jnp.zeros((1, NG * P1W), f32)
    for p, contribs in enumerate(_POOL1):
        for g, s in enumerate(contribs):
            c0 = g * P1W + p * 20
            w1a = w1a.at[:, c0:c0 + 20].set(w1pos[s])
            b1a = b1a.at[:, c0:c0 + 20].set(b1.reshape(1, 20))

    # --- conv2 fused: conv2 output (oi, oj) reads pooled-1 input (ri, rj)
    #     through kernel tap (ri-oi+2, rj-oj+2) when that tap is inside the
    #     3x3 kernel.  Rows follow the pooled-1 lane layout (p*20 + cin, rows
    #     80..127 zero); columns grouped as g*512 + s2*50 + cout.
    w2a = jnp.zeros((P1W, NG * P2W), f32)
    b2a = jnp.zeros((1, NG * P2W), f32)
    for s2, contribs in enumerate(_POOL2):
        for g, pos in enumerate(contribs):
            oi, oj = pos // 4, pos % 4
            c0 = g * P2W + s2 * 50
            b2a = b2a.at[:, c0:c0 + 50].set(b2.reshape(1, 50))
            for p in range(4):                       # pooled-1 input positions
                ri, rj = p // 2, p % 2
                ki, kj = ri - oi + 2, rj - oj + 2
                if 0 <= ki <= 2 and 0 <= kj <= 2:
                    w2a = w2a.at[p * 20:p * 20 + 20, c0:c0 + 50].set(
                        w2[:, :, ki, kj].T)          # (20, 50)

    # --- Linear(450, 500): permute torch flatten order (cout*9 + s2) into the
    #     pooled-2 lane layout (s2*50 + cout); pad 450->512 rows, 500->512 cols.
    wfe2p = jnp.transpose(wfe2.reshape(L, 50, 9), (2, 1, 0)).reshape(450, L)
    wfe2a = jnp.zeros((P2W, LP), f32).at[:450, :L].set(wfe2p)
    bfe2a = jnp.zeros((1, LP), f32).at[:, :L].set(bfe2.reshape(1, L))

    # --- attention / classifier (1-column linears stay f32 VPU reductions) ---
    wa1a = jnp.zeros((LP, D), f32).at[:L, :].set(wa1.T)
    wca = jnp.zeros((1, LP), f32).at[:, :L].set(wc.reshape(1, L * K))

    # bf16 (default; valid on v5e's MXU too -- only its VPU/EUP lack bf16) or
    # f32 operands for the 4 big matmuls; biases / element-wise stay f32.
    return (w1a.astype(mxu_dtype), b1a,
            w2a.astype(mxu_dtype), b2a,
            wfe2a.astype(mxu_dtype), bfe2a,
            wa1a.astype(mxu_dtype), ba1.reshape(1, D),
            wa2.reshape(1, D), ba2.reshape(1, 1),
            wca, bc.reshape(1, 1))


# ----------------------------------------------------------------------------
# Forward: one pallas_call, 1-D grid over bags, weights VMEM-resident
# ----------------------------------------------------------------------------
def attention_mnist_forward(x_bags, packed):
    """x_bags: (B, N, z_dim, 1, 1) NCHW bags stacked along a leading bag axis.
    Returns (Y_prob (B,1,1), Y_hat (B,1,1), A (B,1,N)) -- per-bag outputs with
    the same semantics as the PyTorch module's (Y_prob, Y_hat, A)."""
    B, N, z_dim, hh, ww = x_bags.shape
    assert hh == 1 and ww == 1, "latent image must be 1x1 (flatten dim == 450)"
    x3d = x_bags.reshape(B, N, z_dim).astype(jnp.float32)
    out_w = max(128, ((N + 1 + 127) // 128) * 128)

    # One grid step per bag; weight BlockSpecs use constant index_maps so each
    # weight is DMA'd to VMEM once and stays resident across all grid steps.
    def resident(a):
        return pl.BlockSpec(a.shape, lambda b: (0,) * a.ndim)

    in_specs = [pl.BlockSpec((None, N, z_dim), lambda b: (b, 0, 0))]
    in_specs += [resident(a) for a in packed]

    out = pl.pallas_call(
        _attention_mil_kernel,
        grid=(B,),
        out_shape=jax.ShapeDtypeStruct((B, 8, out_w), jnp.float32),
        in_specs=in_specs,
        out_specs=pl.BlockSpec((None, 8, out_w), lambda b: (b, 0, 0)),
        compiler_params=pltpu.CompilerParams(
            dimension_semantics=("parallel",)),  # v7x: bags split across 2 TCs
    )(x3d, *packed)

    rowp = out[:, 0, :]                            # (B, out_w) packed rows
    y_prob = rowp[:, 0:1].reshape(B, 1, 1)
    A = rowp[:, 1:1 + N].reshape(B, 1, N)
    y_hat = (y_prob >= 0.5).astype(jnp.float32)    # pure threshold -> wrapper
    return y_prob, y_hat, A


# ----------------------------------------------------------------------------
# Deterministic synthetic parameters (shapes from the module's __init__)
# ----------------------------------------------------------------------------
def init_params(key, z_dim):
    ks = jax.random.split(key, 11)

    def w(k, shape, scale):
        return (scale * jax.random.normal(k, shape)).astype(jnp.float32)

    return (
        w(ks[0], (20, z_dim, 3, 3), 0.2), w(ks[1], (20,), 0.1),    # conv1
        w(ks[2], (50, 20, 3, 3), 0.1),    w(ks[3], (50,), 0.1),    # conv2
        w(ks[4], (L, 450), 0.05),         w(ks[5], (L,), 0.05),    # fe part2
        w(ks[6], (D, L), 0.05),           w(ks[7], (D,), 0.05),    # attn 1
        w(ks[8], (K, D), 0.1),            w(ks[9], (K,), 0.1),     # attn 2
        w(ks[10], (1, L * K), 0.05),
        jnp.full((1,), 0.3, jnp.float32),                          # classifier
    )


# ----------------------------------------------------------------------------
# Pure-JAX reference (matches PyTorch semantics) for validation (single bag)
# ----------------------------------------------------------------------------
def reference_forward(x, params):
    (w1, b1, w2, b2, wfe2, bfe2, wa1, ba1, wa2, ba2, wc, bc) = params
    hi = lax.Precision.HIGHEST

    def conv(h, w, b, pad):
        out = lax.conv_general_dilated(
            h, w, (1, 1), ((pad, pad), (pad, pad)),
            dimension_numbers=("NCHW", "OIHW", "NCHW"), precision=hi)
        return out + b[None, :, None, None]

    def maxpool(h, k, s, p):
        return lax.reduce_window(h, -jnp.inf, lax.max, (1, 1, k, k),
                                 (1, 1, s, s),
                                 ((0, 0), (0, 0), (p, p), (p, p)))

    h = jnp.maximum(conv(x, w1, b1, 2), 0.0)
    h = maxpool(h, 2, 2, 1)
    h = jnp.maximum(conv(h, w2, b2, 2), 0.0)
    h = maxpool(h, 2, 2, 1)
    H0 = h.reshape(h.shape[0], -1)                                  # (N, 450)
    H = jnp.maximum(jnp.dot(H0, wfe2.T, precision=hi) + bfe2, 0.0)  # (N, 500)
    a = jnp.dot(jnp.tanh(jnp.dot(H, wa1.T, precision=hi) + ba1),
                wa2.T, precision=hi) + ba2                          # (N, 1)
    A = jax.nn.softmax(a.T, axis=1)                                 # (1, N)
    M = jnp.dot(A, H, precision=hi)                                 # (1, 500)
    Yp = jax.nn.sigmoid(jnp.dot(M, wc.T, precision=hi) + bc)        # (1, 1)
    Yh = (Yp >= 0.5).astype(jnp.float32)
    return Yp, Yh, A


if __name__ == "__main__":
    key = jax.random.PRNGKey(0)
    kx, kp = jax.random.split(key)

    B_BAGS, N_INST, Z_DIM = 3, 8, 16
    x_bags = jax.random.normal(kx, (B_BAGS, N_INST, Z_DIM, 1, 1), jnp.float32)
    params = init_params(kp, Z_DIM)

    fwd = jax.jit(attention_mnist_forward)

    # f32 MXU operands: strict per-bag check against the pure-JAX reference.
    packed_f32 = pack_params(params, mxu_dtype=jnp.float32)
    y_prob, y_hat, A = jax.block_until_ready(fwd(x_bags, packed_f32))
    assert y_prob.shape == (B_BAGS, 1, 1) and y_hat.shape == (B_BAGS, 1, 1)
    assert A.shape == (B_BAGS, 1, N_INST)
    for i in range(B_BAGS):
        yp_r, yh_r, A_r = reference_forward(x_bags[i], params)
        assert jnp.allclose(y_prob[i], yp_r, atol=5e-3, rtol=5e-3), (i, y_prob[i], yp_r)
        assert jnp.allclose(A[i], A_r, atol=5e-3, rtol=5e-3), (i, A[i], A_r)
        assert jnp.array_equal(y_hat[i], yh_r), (i, y_hat[i], yh_r)

    # Default bf16 MXU operands (valid on v5e/v6e/v7x): halves resident weight
    # bytes; accumulation and element-wise/softmax math stay f32.
    packed_bf16 = pack_params(params)
    yp_b, _, A_b = jax.block_until_ready(fwd(x_bags, packed_bf16))
    for i in range(B_BAGS):
        yp_r, _, A_r = reference_forward(x_bags[i], params)
        assert jnp.allclose(yp_b[i], yp_r, atol=3e-2, rtol=3e-2), (i, yp_b[i], yp_r)
        assert jnp.allclose(A_b[i], A_r, atol=3e-2, rtol=3e-2), (i, A_b[i], A_r)

    print("KERNEL_OK")
</pallas_src>

<mosaic_0001>
module attributes {stable_mosaic.version = 11 : i64} {
  func.func @_attention_mil_kernel(%arg0: i32, %arg1: memref<1x8x16xf32, #tpu.memory_space<vmem>>, %arg2: memref<16x512xf32, #tpu.memory_space<vmem>>, %arg3: memref<1x512xf32, #tpu.memory_space<vmem>>, %arg4: memref<128x2048xf32, #tpu.memory_space<vmem>>, %arg5: memref<1x2048xf32, #tpu.memory_space<vmem>>, %arg6: memref<512x512xf32, #tpu.memory_space<vmem>>, %arg7: memref<1x512xf32, #tpu.memory_space<vmem>>, %arg8: memref<512x128xf32, #tpu.memory_space<vmem>>, %arg9: memref<1x128xf32, #tpu.memory_space<vmem>>, %arg10: memref<1x128xf32, #tpu.memory_space<vmem>>, %arg11: memref<1x1xf32, #tpu.memory_space<vmem>>, %arg12: memref<1x512xf32, #tpu.memory_space<vmem>>, %arg13: memref<1x1xf32, #tpu.memory_space<vmem>>, %arg14: memref<1x8x128xf32, #tpu.memory_space<vmem>>) attributes {dimension_semantics = [#tpu.dimension_semantics<parallel>], iteration_bounds = array<i64: 3>, scalar_prefetch = 0 : i64, scratch_operands = 0 : i64, tpu.core_type = #tpu.core_type<tc>, window_params = [{transform_indices = @transform_0, window_bounds = array<i64: 1, 8, 16>}, {pipeline_mode = #tpu.pipeline_mode<synchronous>, transform_indices = @transform_1, window_bounds = array<i64: 16, 512>}, {pipeline_mode = #tpu.pipeline_mode<synchronous>, transform_indices = @transform_2, window_bounds = array<i64: 1, 512>}, {pipeline_mode = #tpu.pipeline_mode<synchronous>, transform_indices = @transform_3, window_bounds = array<i64: 128, 2048>}, {pipeline_mode = #tpu.pipeline_mode<synchronous>, transform_indices = @transform_4, window_bounds = array<i64: 1, 2048>}, {pipeline_mode = #tpu.pipeline_mode<synchronous>, transform_indices = @transform_5, window_bounds = array<i64: 512, 512>}, {pipeline_mode = #tpu.pipeline_mode<synchronous>, transform_indices = @transform_6, window_bounds = array<i64: 1, 512>}, {pipeline_mode = #tpu.pipeline_mode<synchronous>, transform_indices = @transform_7, window_bounds = array<i64: 512, 128>}, {pipeline_mode = #tpu.pipeline_mode<synchronous>, transform_indices = @transform_8, window_bounds = array<i64: 1, 128>}, {pipeline_mode = #tpu.pipeline_mode<synchronous>, transform_indices = @transform_9, window_bounds = array<i64: 1, 128>}, {pipeline_mode = #tpu.pipeline_mode<synchronous>, transform_indices = @transform_10, window_bounds = array<i64: 1, 1>}, {pipeline_mode = #tpu.pipeline_mode<synchronous>, transform_indices = @transform_11, window_bounds = array<i64: 1, 512>}, {pipeline_mode = #tpu.pipeline_mode<synchronous>, transform_indices = @transform_12, window_bounds = array<i64: 1, 1>}, {transform_indices = @transform_13, window_bounds = array<i64: 1, 8, 128>}]} {
    %c0 = arith.constant 0 : index
    %c0_0 = arith.constant 0 : index
    %c0_1 = arith.constant 0 : index
    %0 = vector.load %arg1[%c0, %c0_0, %c0_1] : memref<1x8x16xf32, #tpu.memory_space<vmem>>, vector<1x8x16xf32>
    %1 = vector.shape_cast %0 : vector<1x8x16xf32> to vector<8x16xf32>
    %c0_2 = arith.constant 0 : index
    %c0_3 = arith.constant 0 : index
    %2 = vector.load %arg2[%c0_2, %c0_3] : memref<16x512xf32, #tpu.memory_space<vmem>>, vector<16x512xf32>
    %cst = arith.constant dense<0.000000e+00> : vector<8x512xf32>
    %3 = tpu.matmul %1, %2, %cst {dimension_numbers = #tpu.dot_dimension_numbers<[1], [0], [0], [1], [0, 0, 1, 1], [], []>} : vector<8x16xf32>, vector<16x512xf32>, vector<8x512xf32> -> vector<8x512xf32>
    %c0_4 = arith.constant 0 : index
    %c0_5 = arith.constant 0 : index
    %4 = vector.load %arg3[%c0_4, %c0_5] : memref<1x512xf32, #tpu.memory_space<vmem>>, vector<1x512xf32>
    %5 = vector.broadcast %4 : vector<1x512xf32> to vector<8x512xf32>
    %6 = arith.addf %3, %5 : vector<8x512xf32>
    %cst_6 = arith.constant 0.000000e+00 : f32
    %7 = vector.broadcast %cst_6 : f32 to vector<8x512xf32>
    %8 = arith.maximumf %6, %7 : vector<8x512xf32>
    %9 = vector.extract_strided_slice %8 {offsets = [0, 0], sizes = [8, 128], strides = [1, 1]} : vector<8x512xf32> to vector<8x128xf32>
    %10 = vector.extract_strided_slice %8 {offsets = [0, 128], sizes = [8, 128], strides = [1, 1]} : vector<8x512xf32> to vector<8x128xf32>
    %11 = arith.maximumf %9, %10 : vector<8x128xf32>
    %12 = vector.extract_strided_slice %8 {offsets = [0, 256], sizes = [8, 128], strides = [1, 1]} : vector<8x512xf32> to vector<8x128xf32>
    %13 = vector.extract_strided_slice %8 {offsets = [0, 384], sizes = [8, 128], strides = [1, 1]} : vector<8x512xf32> to vector<8x128xf32>
    %14 = arith.maximumf %12, %13 : vector<8x128xf32>
    %15 = arith.maximumf %11, %14 : vector<8x128xf32>
    %c0_7 = arith.constant 0 : index
    %c0_8 = arith.constant 0 : index
    %16 = vector.load %arg4[%c0_7, %c0_8] : memref<128x2048xf32, #tpu.memory_space<vmem>>, vector<128x2048xf32>
    %cst_9 = arith.constant dense<0.000000e+00> : vector<8x2048xf32>
    %17 = tpu.matmul %15, %16, %cst_9 {dimension_numbers = #tpu.dot_dimension_numbers<[1], [0], [0], [1], [0, 0, 1, 1], [], []>} : vector<8x128xf32>, vector<128x2048xf32>, vector<8x2048xf32> -> vector<8x2048xf32>
    %c0_10 = arith.constant 0 : index
    %c0_11 = arith.constant 0 : index
    %18 = vector.load %arg5[%c0_10, %c0_11] : memref<1x2048xf32, #tpu.memory_space<vmem>>, vector<1x2048xf32>
    %19 = vector.broadcast %18 : vector<1x2048xf32> to vector<8x2048xf32>
    %20 = arith.addf %17, %19 : vector<8x2048xf32>
    %cst_12 = arith.constant 0.000000e+00 : f32
    %21 = vector.broadcast %cst_12 : f32 to vector<8x2048xf32>
    %22 = arith.maximumf %20, %21 : vector<8x2048xf32>
    %23 = vector.extract_strided_slice %22 {offsets = [0, 0], sizes = [8, 512], strides = [1, 1]} : vector<8x2048xf32> to vector<8x512xf32>
    %24 = vector.extract_strided_slice %22 {offsets = [0, 512], sizes = [8, 512], strides = [1, 1]} : vector<8x2048xf32> to vector<8x512xf32>
    %25 = arith.maximumf %23, %24 : vector<8x512xf32>
    %26 = vector.extract_strided_slice %22 {offsets = [0, 1024], sizes = [8, 512], strides = [1, 1]} : vector<8x2048xf32> to vector<8x512xf32>
    %27 = vector.extract_strided_slice %22 {offsets = [0, 1536], sizes = [8, 512], strides = [1, 1]} : vector<8x2048xf32> to vector<8x512xf32>
    %28 = arith.maximumf %26, %27 : vector<8x512xf32>
    %29 = arith.maximumf %25, %28 : vector<8x512xf32>
    %c0_13 = arith.constant 0 : index
    %c0_14 = arith.constant 0 : index
    %30 = vector.load %arg6[%c0_13, %c0_14] : memref<512x512xf32, #tpu.memory_space<vmem>>, vector<512x512xf32>
    %cst_15 = arith.constant dense<0.000000e+00> : vector<8x512xf32>
    %31 = tpu.matmul %29, %30, %cst_15 {dimension_numbers = #tpu.dot_dimension_numbers<[1], [0], [0], [1], [0, 0, 1, 1], [], []>} : vector<8x512xf32>, vector<512x512xf32>, vector<8x512xf32> -> vector<8x512xf32>
    %c0_16 = arith.constant 0 : index
    %c0_17 = arith.constant 0 : index
    %32 = vector.load %arg7[%c0_16, %c0_17] : memref<1x512xf32, #tpu.memory_space<vmem>>, vector<1x512xf32>
    %33 = vector.broadcast %32 : vector<1x512xf32> to vector<8x512xf32>
    %34 = arith.addf %31, %33 : vector<8x512xf32>
    %cst_18 = arith.constant 0.000000e+00 : f32
    %35 = vector.broadcast %cst_18 : f32 to vector<8x512xf32>
    %36 = arith.maximumf %34, %35 : vector<8x512xf32>
    %c0_19 = arith.constant 0 : index
    %c0_20 = arith.constant 0 : index
    %37 = vector.load %arg8[%c0_19, %c0_20] : memref<512x128xf32, #tpu.memory_space<vmem>>, vector<512x128xf32>
    %cst_21 = arith.constant dense<0.000000e+00> : vector<8x128xf32>
    %38 = tpu.matmul %36, %37, %cst_21 {dimension_numbers = #tpu.dot_dimension_numbers<[1], [0], [0], [1], [0, 0, 1, 1], [], []>} : vector<8x512xf32>, vector<512x128xf32>, vector<8x128xf32> -> vector<8x128xf32>
    %c0_22 = arith.constant 0 : index
    %c0_23 = arith.constant 0 : index
    %39 = vector.load %arg9[%c0_22, %c0_23] : memref<1x128xf32, #tpu.memory_space<vmem>>, vector<1x128xf32>
    %40 = vector.broadcast %39 : vector<1x128xf32> to vector<8x128xf32>
    %41 = arith.addf %38, %40 : vector<8x128xf32>
    %42 = math.tanh %41 : vector<8x128xf32>
    %c0_24 = arith.constant 0 : index
    %c0_25 = arith.constant 0 : index
    %43 = vector.load %arg10[%c0_24, %c0_25] : memref<1x128xf32, #tpu.memory_space<vmem>>, vector<1x128xf32>
    %44 = vector.broadcast %43 : vector<1x128xf32> to vector<8x128xf32>
    %45 = arith.mulf %42, %44 : vector<8x128xf32>
    %cst_26 = arith.constant dense<0.000000e+00> : vector<8xf32>
    %46 = vector.multi_reduction <add>, %45, %cst_26 [1] : vector<8x128xf32> to vector<8xf32>
    %47 = vector.shape_cast %46 : vector<8xf32> to vector<8x1xf32>
    %c0_27 = arith.constant 0 : index
    %c0_28 = arith.constant 0 : index
    %48 = vector.load %arg11[%c0_27, %c0_28] : memref<1x1xf32, #tpu.memory_space<vmem>>, vector<1x1xf32>
    %49 = vector.broadcast %48 : vector<1x1xf32> to vector<8x1xf32>
    %50 = arith.addf %47, %49 : vector<8x1xf32>
    %cst_29 = arith.constant dense<0xFF800000> : vector<1xf32>
    %51 = vector.multi_reduction <maximumf>, %50, %cst_29 [0] : vector<8x1xf32> to vector<1xf32>
    %52 = vector.shape_cast %51 : vector<1xf32> to vector<1x1xf32>
    %53 = vector.broadcast %52 : vector<1x1xf32> to vector<8x1xf32>
    %54 = arith.subf %50, %53 : vector<8x1xf32>
    %55 = math.exp %54 : vector<8x1xf32>
    %cst_30 = arith.constant dense<0.000000e+00> : vector<1xf32>
    %56 = vector.multi_reduction <add>, %55, %cst_30 [0] : vector<8x1xf32> to vector<1xf32>
    %57 = vector.shape_cast %56 : vector<1xf32> to vector<1x1xf32>
    %58 = vector.broadcast %57 : vector<1x1xf32> to vector<8x1xf32>
    %59 = arith.divf %55, %58 : vector<8x1xf32>
    %60 = vector.broadcast %59 : vector<8x1xf32> to vector<8x512xf32>
    %61 = arith.mulf %60, %36 : vector<8x512xf32>
    %cst_31 = arith.constant dense<0.000000e+00> : vector<512xf32>
    %62 = vector.multi_reduction <add>, %61, %cst_31 [0] : vector<8x512xf32> to vector<512xf32>
    %63 = vector.shape_cast %62 : vector<512xf32> to vector<1x512xf32>
    %c0_32 = arith.constant 0 : index
    %c0_33 = arith.constant 0 : index
    %64 = vector.load %arg12[%c0_32, %c0_33] : memref<1x512xf32, #tpu.memory_space<vmem>>, vector<1x512xf32>
    %65 = arith.mulf %63, %64 : vector<1x512xf32>
    %cst_34 = arith.constant dense<0.000000e+00> : vector<1xf32>
    %66 = vector.multi_reduction <add>, %65, %cst_34 [1] : vector<1x512xf32> to vector<1xf32>
    %67 = vector.shape_cast %66 : vector<1xf32> to vector<1x1xf32>
    %c0_35 = arith.constant 0 : index
    %c0_36 = arith.constant 0 : index
    %68 = vector.load %arg13[%c0_35, %c0_36] : memref<1x1xf32, #tpu.memory_space<vmem>>, vector<1x1xf32>
    %69 = arith.addf %67, %68 : vector<1x1xf32>
    %cst_37 = arith.constant 0.000000e+00 : f32
    %70 = vector.broadcast %cst_37 : f32 to vector<1x1xf32>
    %71 = arith.subf %70, %69 : vector<1x1xf32>
    %72 = math.exp %71 : vector<1x1xf32>
    %cst_38 = arith.constant 1.000000e+00 : f32
    %73 = vector.broadcast %cst_38 : f32 to vector<1x1xf32>
    %74 = arith.addf %73, %72 : vector<1x1xf32>
    %cst_39 = arith.constant 1.000000e+00 : f32
    %75 = vector.broadcast %cst_39 : f32 to vector<1x1xf32>
    %76 = arith.divf %75, %74 : vector<1x1xf32>
    %77 = tpu.iota {dimensions = array<i32: 0>} : vector<8x128xi32>
    %78 = tpu.iota {dimensions = array<i32: 1>} : vector<8x128xi32>
    %c1_i32 = arith.constant 1 : i32
    %79 = vector.broadcast %c1_i32 : i32 to vector<8x128xi32>
    %80 = arith.addi %77, %79 : vector<8x128xi32>
    %81 = arith.cmpi eq, %78, %80 : vector<8x128xi32>
    %cst_40 = arith.constant 0.000000e+00 : f32
    %82 = vector.shape_cast %59 : vector<8x1xf32> to vector<8x1xf32>
    %83 = vector.broadcast %82 : vector<8x1xf32> to vector<8x128xf32>
    %84 = vector.broadcast %cst_40 : f32 to vector<8x128xf32>
    %85 = arith.select %81, %83, %84 : vector<8x128xi1>, vector<8x128xf32>
    %cst_41 = arith.constant dense<0.000000e+00> : vector<128xf32>
    %86 = vector.multi_reduction <add>, %85, %cst_41 [0] : vector<8x128xf32> to vector<128xf32>
    %87 = vector.shape_cast %86 : vector<128xf32> to vector<1x128xf32>
    %88 = tpu.iota {dimensions = array<i32: 1>} : vector<1x128xi32>
    %c0_i32 = arith.constant 0 : i32
    %89 = vector.broadcast %c0_i32 : i32 to vector<1x128xi32>
    %90 = arith.cmpi eq, %88, %89 : vector<1x128xi32>
    %91 = vector.shape_cast %76 : vector<1x1xf32> to vector<1x1xf32>
    %92 = vector.broadcast %91 : vector<1x1xf32> to vector<1x128xf32>
    %93 = arith.select %90, %92, %87 : vector<1x128xi1>, vector<1x128xf32>
    %94 = vector.shape_cast %93 : vector<1x128xf32> to vector<1x128xf32>
    %95 = vector.broadcast %94 : vector<1x128xf32> to vector<8x128xf32>
    %c0_42 = arith.constant 0 : index
    %c0_43 = arith.constant 0 : index
    %c0_44 = arith.constant 0 : index
    %96 = vector.load %arg14[%c0_42, %c0_43, %c0_44] : memref<1x8x128xf32, #tpu.memory_space<vmem>>, vector<1x8x128xf32>
    %97 = vector.shape_cast %96 : vector<1x8x128xf32> to vector<8x128xf32>
    %98 = vector.shape_cast %95 : vector<8x128xf32> to vector<1x8x128xf32>
    tpu.vector_store %arg14[%c0_42, %c0_43, %c0_44], %98 {strides = array<i32>} : memref<1x8x128xf32, #tpu.memory_space<vmem>>, vector<1x8x128xf32>,
    return
  }
  func.func @transform_0(%arg0: i32) -> (i32, i32, i32) {
    %c0_i32 = arith.constant 0 : i32
    %c0_i32_0 = arith.constant 0 : i32
    %c0_i32_1 = arith.constant 0 : i32
    return %arg0, %c0_i32, %c0_i32_0 : i32, i32, i32
  }
  func.func @transform_1(%arg0: i32) -> (i32, i32) {
    %c0_i32 = arith.constant 0 : i32
    %c0_i32_0 = arith.constant 0 : i32
    %c0_i32_1 = arith.constant 0 : i32
    return %c0_i32, %c0_i32_0 : i32, i32
  }
  func.func @transform_2(%arg0: i32) -> (i32, i32) {
    %c0_i32 = arith.constant 0 : i32
    %c0_i32_0 = arith.constant 0 : i32
    %c0_i32_1 = arith.constant 0 : i32
    return %c0_i32, %c0_i32_0 : i32, i32
  }
  func.func @transform_3(%arg0: i32) -> (i32, i32) {
    %c0_i32 = arith.constant 0 : i32
    %c0_i32_0 = arith.constant 0 : i32
    %c0_i32_1 = arith.constant 0 : i32
    return %c0_i32, %c0_i32_0 : i32, i32
  }
  func.func @transform_4(%arg0: i32) -> (i32, i32) {
    %c0_i32 = arith.constant 0 : i32
    %c0_i32_0 = arith.constant 0 : i32
    %c0_i32_1 = arith.constant 0 : i32
    return %c0_i32, %c0_i32_0 : i32, i32
  }
  func.func @transform_5(%arg0: i32) -> (i32, i32) {
    %c0_i32 = arith.constant 0 : i32
    %c0_i32_0 = arith.constant 0 : i32
    %c0_i32_1 = arith.constant 0 : i32
    return %c0_i32, %c0_i32_0 : i32, i32
  }
  func.func @transform_6(%arg0: i32) -> (i32, i32) {
    %c0_i32 = arith.constant 0 : i32
    %c0_i32_0 = arith.constant 0 : i32
    %c0_i32_1 = arith.constant 0 : i32
    return %c0_i32, %c0_i32_0 : i32, i32
  }
  func.func @transform_7(%arg0: i32) -> (i32, i32) {
    %c0_i32 = arith.constant 0 : i32
    %c0_i32_0 = arith.constant 0 : i32
    %c0_i32_1 = arith.constant 0 : i32
    return %c0_i32, %c0_i32_0 : i32, i32
  }
  func.func @transform_8(%arg0: i32) -> (i32, i32) {
    %c0_i32 = arith.constant 0 : i32
    %c0_i32_0 = arith.constant 0 : i32
    %c0_i32_1 = arith.constant 0 : i32
    return %c0_i32, %c0_i32_0 : i32, i32
  }
  func.func @transform_9(%arg0: i32) -> (i32, i32) {
    %c0_i32 = arith.constant 0 : i32
    %c0_i32_0 = arith.constant 0 : i32
    %c0_i32_1 = arith.constant 0 : i32
    return %c0_i32, %c0_i32_0 : i32, i32
  }
  func.func @transform_10(%arg0: i32) -> (i32, i32) {
    %c0_i32 = arith.constant 0 : i32
    %c0_i32_0 = arith.constant 0 : i32
    %c0_i32_1 = arith.constant 0 : i32
    return %c0_i32, %c0_i32_0 : i32, i32
  }
  func.func @transform_11(%arg0: i32) -> (i32, i32) {
    %c0_i32 = arith.constant 0 : i32
    %c0_i32_0 = arith.constant 0 : i32
    %c0_i32_1 = arith.constant 0 : i32
    return %c0_i32, %c0_i32_0 : i32, i32
  }
  func.func @transform_12(%arg0: i32) -> (i32, i32) {
    %c0_i32 = arith.constant 0 : i32
    %c0_i32_0 = arith.constant 0 : i32
    %c0_i32_1 = arith.constant 0 : i32
    return %c0_i32, %c0_i32_0 : i32, i32
  }
  func.func @transform_13(%arg0: i32) -> (i32, i32, i32) {
    %c0_i32 = arith.constant 0 : i32
    %c0_i32_0 = arith.constant 0 : i32
    %c0_i32_1 = arith.constant 0 : i32
    return %arg0, %c0_i32, %c0_i32_0 : i32, i32, i32
  }
}

</mosaic_0001>

<llo_original>
// kernel: attention_mnist_forward.1
$region0: #{attention_mnist_forward.1}
  #allocation0 [shape = 'u32[]', space=smem, size = 0x4, offset = 0x4, fixed_abs, tag = 'smem constant byte address 0x4 - core index']
  #allocation1 [shape = 'u32[72,128]{1,0:T(1,128)}', space=vmem, size = 0x9000, scoped, tag = 'internal scratch']
  #allocation2 [shape = 'f32[1,1]{1,0:T(1,128)S(1)}', space=vmem, size = 0x200, scoped, tag = 'scoped memory for attention_mnist_forward.1']
  #allocation3 [shape = 'f32[1,1]{1,0:T(1,128)S(1)}', space=vmem, size = 0x200, scoped, tag = 'scoped memory for attention_mnist_forward.1']
  %s0 = inlined_call_operand.hbm [shape: f32[3,8,16], index: 0, kind: input, shape index: {}]
  %s1 = inlined_call_operand.hbm [shape: f32[16,512], index: 1, kind: input, shape index: {}]
  %s2 = inlined_call_operand.vmem [shape: f32[1,512], index: 2, kind: input, shape index: {}]
  %s3 = inlined_call_operand.hbm [shape: f32[128,2048], index: 3, kind: input, shape index: {}]
  %s4 = inlined_call_operand.hbm [shape: f32[1,2048], index: 4, kind: input, shape index: {}]
  %s5 = inlined_call_operand.hbm [shape: f32[512,512], index: 5, kind: input, shape index: {}]
  %s6 = inlined_call_operand.vmem [shape: f32[1,512], index: 6, kind: input, shape index: {}]
  %s7 = inlined_call_operand.hbm [shape: f32[512,128], index: 7, kind: input, shape index: {}]
  %s8 = inlined_call_operand.hbm [shape: f32[1,128], index: 8, kind: input, shape index: {}]
  %s9 = inlined_call_operand.vmem [shape: f32[1,128], index: 9, kind: input, shape index: {}]
  %s10 = inlined_call_operand.<no memory space> [shape: f32[1,1], index: 10, kind: input, shape index: {}]
  %s11 = inlined_call_operand.vmem [shape: f32[1,512], index: 11, kind: input, shape index: {}]
  %s12 = inlined_call_operand.<no memory space> [shape: f32[1,1], index: 12, kind: input, shape index: {}]
  %s13 = inlined_call_operand.vmem [shape: f32[3,8,128], index: 13, kind: output, shape index: {}]
  %s14 = sld [smem:[#allocation0]]
  $region113: #{attention_mnist_forward.1} parent=0
    _
  %s16 = ssub.s32 1, %s14
  %s17 = scalar_select 0, %s16, %s14
  %v18 = vstv %s10
  %19 = vst [vmem:[#allocation2] sm:$0x1] %v18
  %v20 = vstv %s12
  %21 = vst [vmem:[#allocation3] sm:$0x1] %v20
  $region1: #{attention_mnist_forward.1} parent=0
    #allocation4 [shape = 'u8[8192]{0}', space=vmem, size = 0x2000, scoped, tag = 'input window, operand 0']
    #allocation5 [shape = 's32[2]{0}', space=sflag, size = 0x8, scoped, tag = 'scoped memory for attention_mnist_forward.1']
    #allocation6 [shape = 'u8[32768]{0}', space=vmem, size = 0x8000, scoped, tag = 'input window, operand 1, single buffered']
    #allocation7 [shape = 's32[1]{0}', space=sflag, size = 0x4, scoped, tag = 'scoped memory for attention_mnist_forward.1']
    #allocation8 [shape = 'u8[1048576]{0}', space=vmem, size = 0x100000, scoped, tag = 'input window, operand 3, single buffered']
    #allocation9 [shape = 'u8[8192]{0}', space=vmem, size = 0x2000, scoped, tag = 'input window, operand 4, single buffered']
    #allocation10 [shape = 's32[1]{0}', space=sflag, size = 0x4, scoped, tag = 'scoped memory for attention_mnist_forward.1']
    #allocation11 [shape = 'u8[1048576]{0}', space=vmem, size = 0x100000, scoped, tag = 'input window, operand 5, single buffered']
    #allocation12 [shape = 'u8[262144]{0}', space=vmem, size = 0x40000, scoped, tag = 'input window, operand 7, single buffered']
    #allocation13 [shape = 's32[1]{0}', space=sflag, size = 0x4, scoped, tag = 'scoped memory for attention_mnist_forward.1']
    #allocation14 [shape = 'u8[512]{0}', space=vmem, size = 0x400, scoped, tag = 'input window, operand 8, single buffered']
    %22 = vsyncpa [#allocation5], 0
    %s23 = scalar_lea.sflag [#allocation5], 1
    %24 = vsyncpa %s23, 0
    %25 = vsyncpa [#allocation7], 0
    %26 = vsyncpa [#allocation10], 0
    %27 = vsyncpa [#allocation13], 0
    loop: start=0, step=1, limit=5
    $region2: #{attention_mnist_forward.1} parent=1 // loop_pre_header
      _
    $region3: #{attention_mnist_forward.1} parent=1 // loop_header
      %s29 = sphi 0, %s33
      %p30 = scmp.ge.s32.totalorder %s29, 5
      %s39 = sphi 0, %s41
      %s42 = sphi 0, %s39
      %s43 = sphi 0, %s42
      %s59 = sphi 0, %s43
      %s63 = sphi 0, %s63
      %s65 = sphi 0, %s63
      %s66 = sphi 0, %s65
      %s80 = sphi 0, %s66
      %s84 = sphi 0, %s84
      %s86 = sphi 0, %s84
      %s87 = sphi 0, %s86
      %s101 = sphi 0, %s87
      %s105 = sphi 0, %s105
      %s107 = sphi 0, %s105
      %s108 = sphi 0, %s107
      %s122 = sphi 0, %s108
      %s126 = sphi 0, %s126
      %s128 = sphi 0, %s126
      %s129 = sphi 0, %s128
      %s143 = sphi 0, %s129
      %s147 = sphi 0, %s147
      %s149 = sphi 0, %s147
      %s150 = sphi 0, %s149
      %s164 = sphi 0, %s150
      %s168 = sphi 0, %s168
      %s170 = sphi 0, %s168
      %s171 = sphi 0, %s170
      %s185 = sphi 0, %s171
      %s189 = sphi 0, %s189
      %s191 = sphi 0, %s189
      %s192 = sphi 0, %s191
      %s206 = sphi 0, %s192
      %s210 = sphi 0, %s210
      %s212 = sphi 0, %s210
      %s213 = sphi 0, %s212
      %s227 = sphi 0, %s213
      %s231 = sphi 0, %s231
      %s233 = sphi 0, %s231
      %s234 = sphi 0, %s233
      %s248 = sphi 0, %s234
      %s252 = sphi 0, %s252
      %s254 = sphi 0, %s252
      %s255 = sphi 0, %s254
      %s269 = sphi 0, %s255
      %s273 = sphi 0, %s273
      %s275 = sphi 0, %s273
      %s276 = sphi 0, %s275
      %s290 = sphi 0, %s276
      %s294 = sphi 0, %s294
      %s296 = sphi 0, %s294
      %s297 = sphi 0, %s296
      %s311 = sphi 0, %s297
      %s317 = sphi 0, %s319
      %s320 = sphi 0, %s317
      %s321 = sphi 0, %s320
      %s337 = sphi 0, %s321
    $region4: #{attention_mnist_forward.1} parent=1 // loop_header_branch
      %32 = sbr.rel (%p30) target = $region8
    $region5: #{attention_mnist_forward.1} parent=1 // loop_body
      %s34 = ssub.s32 %s29, 1
      %s35 = ssub.s32 %s29, 2
      %s36 = sadd.s32 %s29, 1
      %s37 = ssub.s32 %s29, %s36
      %p38 = scmp.eq.s32.totalorder %s37, 0
      %s40 = sadd.s32 %s39, 1
      %s41 = scalar_select %p38, %s39, %s40
      %p44 = pneg %p38
      %p45 = scmp.eq.s32.totalorder %s29, 2
      %p46 = por %p44, %p45
      %p47 = scmp.ne.s32.totalorder %s39, %s42
      %p48 = scmp.eq.s32.totalorder %s29, 0
      %p49 = por %p47, %p48
      %p50 = scmp.ne.s32.totalorder %s39, %s42
      %p51 = scmp.eq.s32.totalorder %s34, 2
      %p52 = por %p50, %p51
      %p53 = scmp.ne.s32.totalorder %s42, %s43
      %p54 = scmp.eq.s32.totalorder %s34, 0
      %p55 = por %p53, %p54
      %p56 = scmp.ne.s32.totalorder %s42, %s43
      %p57 = scmp.eq.s32.totalorder %s35, 2
      %p58 = por %p56, %p57
      %p60 = scmp.ne.s32.totalorder %s43, %s59
      %p61 = scmp.eq.s32.totalorder %s35, 0
      %p62 = por %p60, %p61
      %s64 = sadd.s32 %s63, 1
      %p67 = scmp.eq.s32.totalorder %s29, 2
      %p68 = scmp.ne.s32.totalorder %s63, %s65
      %p69 = scmp.eq.s32.totalorder %s29, 0
      %p70 = por %p68, %p69
      %p71 = scmp.ne.s32.totalorder %s63, %s65
      %p72 = scmp.eq.s32.totalorder %s34, 2
      %p73 = por %p71, %p72
      %p74 = scmp.ne.s32.totalorder %s65, %s66
      %p75 = scmp.eq.s32.totalorder %s34, 0
      %p76 = por %p74, %p75
      %p77 = scmp.ne.s32.totalorder %s65, %s66
      %p78 = scmp.eq.s32.totalorder %s35, 2
      %p79 = por %p77, %p78
      %p81 = scmp.ne.s32.totalorder %s66, %s80
      %p82 = scmp.eq.s32.totalorder %s35, 0
      %p83 = por %p81, %p82
      %s85 = sadd.s32 %s84, 1
      %p88 = scmp.eq.s32.totalorder %s29, 2
      %p89 = scmp.ne.s32.totalorder %s84, %s86
      %p90 = scmp.eq.s32.totalorder %s29, 0
      %p91 = por %p89, %p90
      %p92 = scmp.ne.s32.totalorder %s84, %s86
      %p93 = scmp.eq.s32.totalorder %s34, 2
      %p94 = por %p92, %p93
      %p95 = scmp.ne.s32.totalorder %s86, %s87
      %p96 = scmp.eq.s32.totalorder %s34, 0
      %p97 = por %p95, %p96
      %p98 = scmp.ne.s32.totalorder %s86, %s87
      %p99 = scmp.eq.s32.totalorder %s35, 2
      %p100 = por %p98, %p99
      %p102 = scmp.ne.s32.totalorder %s87, %s101
      %p103 = scmp.eq.s32.totalorder %s35, 0
      %p104 = por %p102, %p103
      %s106 = sadd.s32 %s105, 1
      %p109 = scmp.eq.s32.totalorder %s29, 2
      %p110 = scmp.ne.s32.totalorder %s105, %s107
      %p111 = scmp.eq.s32.totalorder %s29, 0
      %p112 = por %p110, %p111
      %p113 = scmp.ne.s32.totalorder %s105, %s107
      %p114 = scmp.eq.s32.totalorder %s34, 2
      %p115 = por %p113, %p114
      %p116 = scmp.ne.s32.totalorder %s107, %s108
      %p117 = scmp.eq.s32.totalorder %s34, 0
      %p118 = por %p116, %p117
      %p119 = scmp.ne.s32.totalorder %s107, %s108
      %p120 = scmp.eq.s32.totalorder %s35, 2
      %p121 = por %p119, %p120
      %p123 = scmp.ne.s32.totalorder %s108, %s122
      %p124 = scmp.eq.s32.totalorder %s35, 0
      %p125 = por %p123, %p124
      %s127 = sadd.s32 %s126, 1
      %p130 = scmp.eq.s32.totalorder %s29, 2
      %p131 = scmp.ne.s32.totalorder %s126, %s128
      %p132 = scmp.eq.s32.totalorder %s29, 0
      %p133 = por %p131, %p132
      %p134 = scmp.ne.s32.totalorder %s126, %s128
      %p135 = scmp.eq.s32.totalorder %s34, 2
      %p136 = por %p134, %p135
      %p137 = scmp.ne.s32.totalorder %s128, %s129
      %p138 = scmp.eq.s32.totalorder %s34, 0
      %p139 = por %p137, %p138
      %p140 = scmp.ne.s32.totalorder %s128, %s129
      %p141 = scmp.eq.s32.totalorder %s35, 2
      %p142 = por %p140, %p141
      %p144 = scmp.ne.s32.totalorder %s129, %s143
      %p145 = scmp.eq.s32.totalorder %s35, 0
      %p146 = por %p144, %p145
      %s148 = sadd.s32 %s147, 1
      %p151 = scmp.eq.s32.totalorder %s29, 2
      %p152 = scmp.ne.s32.totalorder %s147, %s149
      %p153 = scmp.eq.s32.totalorder %s29, 0
      %p154 = por %p152, %p153
      %p155 = scmp.ne.s32.totalorder %s147, %s149
      %p156 = scmp.eq.s32.totalorder %s34, 2
      %p157 = por %p155, %p156
      %p158 = scmp.ne.s32.totalorder %s149, %s150
      %p159 = scmp.eq.s32.totalorder %s34, 0
      %p160 = por %p158, %p159
      %p161 = scmp.ne.s32.totalorder %s149, %s150
      %p162 = scmp.eq.s32.totalorder %s35, 2
      %p163 = por %p161, %p162
      %p165 = scmp.ne.s32.totalorder %s150, %s164
      %p166 = scmp.eq.s32.totalorder %s35, 0
      %p167 = por %p165, %p166
      %s169 = sadd.s32 %s168, 1
      %p172 = scmp.eq.s32.totalorder %s29, 2
      %p173 = scmp.ne.s32.totalorder %s168, %s170
      %p174 = scmp.eq.s32.totalorder %s29, 0
      %p175 = por %p173, %p174
      %p176 = scmp.ne.s32.totalorder %s168, %s170
      %p177 = scmp.eq.s32.totalorder %s34, 2
      %p178 = por %p176, %p177
      %p179 = scmp.ne.s32.totalorder %s170, %s171
      %p180 = scmp.eq.s32.totalorder %s34, 0
      %p181 = por %p179, %p180
      %p182 = scmp.ne.s32.totalorder %s170, %s171
      %p183 = scmp.eq.s32.totalorder %s35, 2
      %p184 = por %p182, %p183
      %p186 = scmp.ne.s32.totalorder %s171, %s185
      %p187 = scmp.eq.s32.totalorder %s35, 0
      %p188 = por %p186, %p187
      %s190 = sadd.s32 %s189, 1
      %p193 = scmp.eq.s32.totalorder %s29, 2
      %p194 = scmp.ne.s32.totalorder %s189, %s191
      %p195 = scmp.eq.s32.totalorder %s29, 0
      %p196 = por %p194, %p195
      %p197 = scmp.ne.s32.totalorder %s189, %s191
      %p198 = scmp.eq.s32.totalorder %s34, 2
      %p199 = por %p197, %p198
      %p200 = scmp.ne.s32.totalorder %s191, %s192
      %p201 = scmp.eq.s32.totalorder %s34, 0
      %p202 = por %p200, %p201
      %p203 = scmp.ne.s32.totalorder %s191, %s192
      %p204 = scmp.eq.s32.totalorder %s35, 2
      %p205 = por %p203, %p204
      %p207 = scmp.ne.s32.totalorder %s192, %s206
      %p208 = scmp.eq.s32.totalorder %s35, 0
      %p209 = por %p207, %p208
      %s211 = sadd.s32 %s210, 1
      %p214 = scmp.eq.s32.totalorder %s29, 2
      %p215 = scmp.ne.s32.totalorder %s210, %s212
      %p216 = scmp.eq.s32.totalorder %s29, 0
      %p217 = por %p215, %p216
      %p218 = scmp.ne.s32.totalorder %s210, %s212
      %p219 = scmp.eq.s32.totalorder %s34, 2
      %p220 = por %p218, %p219
      %p221 = scmp.ne.s32.totalorder %s212, %s213
      %p222 = scmp.eq.s32.totalorder %s34, 0
      %p223 = por %p221, %p222
      %p224 = scmp.ne.s32.totalorder %s212, %s213
      %p225 = scmp.eq.s32.totalorder %s35, 2
      %p226 = por %p224, %p225
      %p228 = scmp.ne.s32.totalorder %s213, %s227
      %p229 = scmp.eq.s32.totalorder %s35, 0
      %p230 = por %p228, %p229
      %s232 = sadd.s32 %s231, 1
      %p235 = scmp.eq.s32.totalorder %s29, 2
      %p236 = scmp.ne.s32.totalorder %s231, %s233
      %p237 = scmp.eq.s32.totalorder %s29, 0
      %p238 = por %p236, %p237
      %p239 = scmp.ne.s32.totalorder %s231, %s233
      %p240 = scmp.eq.s32.totalorder %s34, 2
      %p241 = por %p239, %p240
      %p242 = scmp.ne.s32.totalorder %s233, %s234
      %p243 = scmp.eq.s32.totalorder %s34, 0
      %p244 = por %p242, %p243
      %p245 = scmp.ne.s32.totalorder %s233, %s234
      %p246 = scmp.eq.s32.totalorder %s35, 2
      %p247 = por %p245, %p246
      %p249 = scmp.ne.s32.totalorder %s234, %s248
      %p250 = scmp.eq.s32.totalorder %s35, 0
      %p251 = por %p249, %p250
      %s253 = sadd.s32 %s252, 1
      %p256 = scmp.eq.s32.totalorder %s29, 2
      %p257 = scmp.ne.s32.totalorder %s252, %s254
      %p258 = scmp.eq.s32.totalorder %s29, 0
      %p259 = por %p257, %p258
      %p260 = scmp.ne.s32.totalorder %s252, %s254
      %p261 = scmp.eq.s32.totalorder %s34, 2
      %p262 = por %p260, %p261
      %p263 = scmp.ne.s32.totalorder %s254, %s255
      %p264 = scmp.eq.s32.totalorder %s34, 0
      %p265 = por %p263, %p264
      %p266 = scmp.ne.s32.totalorder %s254, %s255
      %p267 = scmp.eq.s32.totalorder %s35, 2
      %p268 = por %p266, %p267
      %p270 = scmp.ne.s32.totalorder %s255, %s269
      %p271 = scmp.eq.s32.totalorder %s35, 0
      %p272 = por %p270, %p271
      %s274 = sadd.s32 %s273, 1
      %p277 = scmp.eq.s32.totalorder %s29, 2
      %p278 = scmp.ne.s32.totalorder %s273, %s275
      %p279 = scmp.eq.s32.totalorder %s29, 0
      %p280 = por %p278, %p279
      %p281 = scmp.ne.s32.totalorder %s273, %s275
      %p282 = scmp.eq.s32.totalorder %s34, 2
      %p283 = por %p281, %p282
      %p284 = scmp.ne.s32.totalorder %s275, %s276
      %p285 = scmp.eq.s32.totalorder %s34, 0
      %p286 = por %p284, %p285
      %p287 = scmp.ne.s32.totalorder %s275, %s276
      %p288 = scmp.eq.s32.totalorder %s35, 2
      %p289 = por %p287, %p288
      %p291 = scmp.ne.s32.totalorder %s276, %s290
      %p292 = scmp.eq.s32.totalorder %s35, 0
      %p293 = por %p291, %p292
      %s295 = sadd.s32 %s294, 1
      %p298 = scmp.eq.s32.totalorder %s29, 2
      %p299 = scmp.ne.s32.totalorder %s294, %s296
      %p300 = scmp.eq.s32.totalorder %s29, 0
      %p301 = por %p299, %p300
      %p302 = scmp.ne.s32.totalorder %s294, %s296
      %p303 = scmp.eq.s32.totalorder %s34, 2
      %p304 = por %p302, %p303
      %p305 = scmp.ne.s32.totalorder %s296, %s297
      %p306 = scmp.eq.s32.totalorder %s34, 0
      %p307 = por %p305, %p306
      %p308 = scmp.ne.s32.totalorder %s296, %s297
      %p309 = scmp.eq.s32.totalorder %s35, 2
      %p310 = por %p308, %p309
      %p312 = scmp.ne.s32.totalorder %s297, %s311
      %p313 = scmp.eq.s32.totalorder %s35, 0
      %p314 = por %p312, %p313
      %s315 = ssub.s32 %s29, %s36
      %p316 = scmp.eq.s32.totalorder %s315, 0
      %s318 = sadd.s32 %s317, 1
      %s319 = scalar_select %p316, %s317, %s318
      %p322 = pneg %p316
      %p323 = scmp.eq.s32.totalorder %s29, 2
      %p324 = por %p322, %p323
      %p325 = scmp.ne.s32.totalorder %s317, %s320
      %p326 = scmp.eq.s32.totalorder %s29, 0
      %p327 = por %p325, %p326
      %p328 = scmp.ne.s32.totalorder %s317, %s320
      %p329 = scmp.eq.s32.totalorder %s34, 2
      %p330 = por %p328, %p329
      %p331 = scmp.ne.s32.totalorder %s320, %s321
      %p332 = scmp.eq.s32.totalorder %s34, 0
      %p333 = por %p331, %p332
      %p334 = scmp.ne.s32.totalorder %s320, %s321
      %p335 = scmp.eq.s32.totalorder %s35, 2
      %p336 = por %p334, %p335
      %p338 = scmp.ne.s32.totalorder %s321, %s337
      %p339 = scmp.eq.s32.totalorder %s35, 0
      %p340 = por %p338, %p339
      %p341 = scmp.le.s32.totalorder 1, %s29
      %p342 = scmp.lt.s32.totalorder %s29, 4
      %p343 = pnand %p341, %p342
      %p344 = pneg %p343
      // Predicated region
      $region9: #{attention_mnist_forward.1} parent=5 // pred_check
        _
      $region10: #{attention_mnist_forward.1} parent=5 // pred_check_branch
        %346 = sbr.rel (%p343) target = $region12
      $region11: #{attention_mnist_forward.1} parent=5 // pred_region
        %s347 = ssub.s32 %s29, 1
        // Predicated region
        $region13: #{attention_mnist_forward.1} parent=11 // pred_check
          %p348 = pneg %p76
        $region14: #{attention_mnist_forward.1} parent=11 // pred_check_branch
          %350 = sbr.rel (%p348) target = $region16
        $region15: #{attention_mnist_forward.1} parent=11 // pred_region
          %352 = vsyncadd [#allocation7], 0
          %s353 = sshll.u32 %s1, 4
          %s354 = int_to_ptr.hbm [resolvable:$true] %s353
          %s355 = sshll.u32 [#allocation6], 4
          %s356 = int_to_ptr.vmem [resolvable:$true] %s355
          %361 = dma.hbm_to_vmem [thread:$0]  %s354, 1024, %s356, [#allocation7], 512, 512, 32
        $region16: #{attention_mnist_forward.1} parent=11 // pred_fallthru
          _
        // Predicated region
        $region17: #{attention_mnist_forward.1} parent=11 // pred_check
          %p362 = pneg %p97
        $region18: #{attention_mnist_forward.1} parent=11 // pred_check_branch
          %364 = sbr.rel (%p362) target = $region20
        $region19: #{attention_mnist_forward.1} parent=11 // pred_region
          _
        $region20: #{attention_mnist_forward.1} parent=11 // pred_fallthru
          _
        // Predicated region
        $region21: #{attention_mnist_forward.1} parent=11 // pred_check
          %p365 = pneg %p118
        $region22: #{attention_mnist_forward.1} parent=11 // pred_check_branch
          %367 = sbr.rel (%p365) target = $region24
        $region23: #{attention_mnist_forward.1} parent=11 // pred_region
          %369 = vsyncadd [#allocation7], 0
          %s370 = sshll.u32 %s3, 4
          %s371 = int_to_ptr.hbm [resolvable:$true] %s370
          %s372 = sshll.u32 [#allocation8], 4
          %s373 = int_to_ptr.vmem [resolvable:$true] %s372
          %378 = dma.hbm_to_vmem [thread:$0]  %s371, 32768, %s373, [#allocation7], 2048, 2048, 128
        $region24: #{attention_mnist_forward.1} parent=11 // pred_fallthru
          _
        // Predicated region
        $region25: #{attention_mnist_forward.1} parent=11 // pred_check
          %p379 = pneg %p139
        $region26: #{attention_mnist_forward.1} parent=11 // pred_check_branch
          %381 = sbr.rel (%p379) target = $region28
        $region27: #{attention_mnist_forward.1} parent=11 // pred_region
          %383 = vsyncadd [#allocation10], 0
          %s385 = sshll.u32 %s4, 4
          %s386 = int_to_ptr.hbm [resolvable:$true] %s385
          %s387 = sshll.u32 [#allocation9], 4
          %s388 = int_to_ptr.vmem [resolvable:$true] %s387
          %390 = dma.hbm_to_vmem [thread:$0]  %s386, 256, %s388, [#allocation10]
        $region28: #{attention_mnist_forward.1} parent=11 // pred_fallthru
          _
        // Predicated region
        $region29: #{attention_mnist_forward.1} parent=11 // pred_check
          %p391 = pneg %p160
        $region30: #{attention_mnist_forward.1} parent=11 // pred_check_branch
          %393 = sbr.rel (%p391) target = $region32
        $region31: #{attention_mnist_forward.1} parent=11 // pred_region
          %395 = vsyncadd [#allocation10], 0
          %s396 = sshll.u32 %s5, 4
          %s397 = int_to_ptr.hbm [resolvable:$true] %s396
          %s398 = sshll.u32 [#allocation11], 4
          %s399 = int_to_ptr.vmem [resolvable:$true] %s398
          %404 = dma.hbm_to_vmem [thread:$0]  %s397, 32768, %s399, [#allocation10], 512, 512, 32
        $region32: #{attention_mnist_forward.1} parent=11 // pred_fallthru
          _
        // Predicated region
        $region33: #{attention_mnist_forward.1} parent=11 // pred_check
          %p405 = pneg %p181
        $region34: #{attention_mnist_forward.1} parent=11 // pred_check_branch
          %407 = sbr.rel (%p405) target = $region36
        $region35: #{attention_mnist_forward.1} parent=11 // pred_region
          _
        $region36: #{attention_mnist_forward.1} parent=11 // pred_fallthru
          _
        // Predicated region
        $region37: #{attention_mnist_forward.1} parent=11 // pred_check
          %p408 = pneg %p202
        $region38: #{attention_mnist_forward.1} parent=11 // pred_check_branch
          %410 = sbr.rel (%p408) target = $region40
        $region39: #{attention_mnist_forward.1} parent=11 // pred_region
          %412 = vsyncadd [#allocation13], 0
          %s413 = sshll.u32 %s7, 4
          %s414 = int_to_ptr.hbm [resolvable:$true] %s413
          %s415 = sshll.u32 [#allocation12], 4
          %s416 = int_to_ptr.vmem [resolvable:$true] %s415
          %421 = dma.hbm_to_vmem [thread:$0]  %s414, 8192, %s416, [#allocation13], 128, 128, 8
        $region40: #{attention_mnist_forward.1} parent=11 // pred_fallthru
          _
        // Predicated region
        $region41: #{attention_mnist_forward.1} parent=11 // pred_check
          %p422 = pneg %p223
        $region42: #{attention_mnist_forward.1} parent=11 // pred_check_branch
          %424 = sbr.rel (%p422) target = $region44
        $region43: #{attention_mnist_forward.1} parent=11 // pred_region
          %426 = vsyncadd [#allocation13], 0
          %s428 = sshll.u32 %s8, 4
          %s429 = int_to_ptr.hbm [resolvable:$true] %s428
          %s430 = sshll.u32 [#allocation14], 4
          %s431 = int_to_ptr.vmem [resolvable:$true] %s430
          %433 = dma.hbm_to_vmem [thread:$0]  %s429, 16, %s431, [#allocation13]
        $region44: #{attention_mnist_forward.1} parent=11 // pred_fallthru
          _
        // Predicated region
        $region45: #{attention_mnist_forward.1} parent=11 // pred_check
          %p434 = pneg %p244
        $region46: #{attention_mnist_forward.1} parent=11 // pred_check_branch
          %436 = sbr.rel (%p434) target = $region48
        $region47: #{attention_mnist_forward.1} parent=11 // pred_region
          _
        $region48: #{attention_mnist_forward.1} parent=11 // pred_fallthru
          _
        // Predicated region
        $region49: #{attention_mnist_forward.1} parent=11 // pred_check
          %p437 = pneg %p265
        $region50: #{attention_mnist_forward.1} parent=11 // pred_check_branch
          %439 = sbr.rel (%p437) target = $region52
        $region51: #{attention_mnist_forward.1} parent=11 // pred_region
          _
        $region52: #{attention_mnist_forward.1} parent=11 // pred_fallthru
          _
        // Predicated region
        $region53: #{attention_mnist_forward.1} parent=11 // pred_check
          %p440 = pneg %p286
        $region54: #{attention_mnist_forward.1} parent=11 // pred_check_branch
          %442 = sbr.rel (%p440) target = $region56
        $region55: #{attention_mnist_forward.1} parent=11 // pred_region
          _
        $region56: #{attention_mnist_forward.1} parent=11 // pred_fallthru
          _
        // Predicated region
        $region57: #{attention_mnist_forward.1} parent=11 // pred_check
          %p443 = pneg %p307
        $region58: #{attention_mnist_forward.1} parent=11 // pred_check_branch
          %445 = sbr.rel (%p443) target = $region60
        $region59: #{attention_mnist_forward.1} parent=11 // pred_region
          _
        $region60: #{attention_mnist_forward.1} parent=11 // pred_fallthru
          _
      $region12: #{attention_mnist_forward.1} parent=5 // pred_fallthru
        _
      %p446 = scmp.lt.s32.totalorder %s29, 3
      // Predicated region
      $region61: #{attention_mnist_forward.1} parent=5 // pred_check
        %p447 = pneg %p446
      $region62: #{attention_mnist_forward.1} parent=5 // pred_check_branch
        %449 = sbr.rel (%p447) target = $region64
      $region63: #{attention_mnist_forward.1} parent=5 // pred_region
        // Predicated region
        $region65: #{attention_mnist_forward.1} parent=63 // pred_check
          %p450 = pneg %p49
        $region66: #{attention_mnist_forward.1} parent=63 // pred_check_branch
          %452 = sbr.rel (%p450) target = $region68
        $region67: #{attention_mnist_forward.1} parent=63 // pred_region
          %s453 = sand.u32 %s39, 1
          %s454 = scalar_lea.sflag [#allocation5], %s453
          %s455 = sand.u32 %s39, 1
          %s456 = smul.addr %s455, 8
          %s457 = scalar_lea.vmem [#allocation4], %s456
          %459 = vsyncadd %s454, 0
          %s460 = smul.addr %s29, 8
          %s461 = scalar_lea.hbm %s0, %s460
          %s463 = sshll.u32 %s461, 4
          %s464 = int_to_ptr.hbm [resolvable:$true] %s463
          %s465 = sshll.u32 %s457, 4
          %s466 = int_to_ptr.vmem [resolvable:$true] %s465
          %468 = dma.hbm_to_vmem [thread:$0]  %s464, 128, %s466, %s454
        $region68: #{attention_mnist_forward.1} parent=63 // pred_fallthru
          _
      $region64: #{attention_mnist_forward.1} parent=5 // pred_fallthru
        _
      %p469 = scmp.le.s32.totalorder 1, %s29
      %p470 = scmp.lt.s32.totalorder %s29, 4
      %p471 = pnand %p469, %p470
      %p472 = pneg %p471
      // Predicated region
      $region69: #{attention_mnist_forward.1} parent=5 // pred_check
        _
      $region70: #{attention_mnist_forward.1} parent=5 // pred_check_branch
        %474 = sbr.rel (%p471) target = $region72
      $region71: #{attention_mnist_forward.1} parent=5 // pred_region
        %s475 = ssub.s32 %s29, 1
        %s476 = sand.u32 %s42, 1
        %s477 = scalar_lea.sflag [#allocation5], %s476
        %s478 = sand.u32 %s42, 1
        %s479 = smul.addr %s478, 8
        %s480 = scalar_lea.vmem [#allocation4], %s479
        // Predicated region
        $region73: #{attention_mnist_forward.1} parent=71 // pred_check
          %p481 = pneg %p55
        $region74: #{attention_mnist_forward.1} parent=71 // pred_check_branch
          %483 = sbr.rel (%p481) target = $region76
        $region75: #{attention_mnist_forward.1} parent=71 // pred_region
          %485 = dma.done %s477, 128
        $region76: #{attention_mnist_forward.1} parent=71 // pred_fallthru
          _
        // Predicated region
        $region77: #{attention_mnist_forward.1} parent=71 // pred_check
          %p486 = pneg %p76
        $region78: #{attention_mnist_forward.1} parent=71 // pred_check_branch
          %488 = sbr.rel (%p486) target = $region80
        $region79: #{attention_mnist_forward.1} parent=71 // pred_region
          %490 = dma.done [#allocation7], 1024
        $region80: #{attention_mnist_forward.1} parent=71 // pred_fallthru
          _
        // Predicated region
        $region81: #{attention_mnist_forward.1} parent=71 // pred_check
          %p491 = pneg %p118
        $region82: #{attention_mnist_forward.1} parent=71 // pred_check_branch
          %493 = sbr.rel (%p491) target = $region84
        $region83: #{attention_mnist_forward.1} parent=71 // pred_region
          %495 = dma.done [#allocation7], 32768
        $region84: #{attention_mnist_forward.1} parent=71 // pred_fallthru
          _
        // Predicated region
        $region85: #{attention_mnist_forward.1} parent=71 // pred_check
          %p496 = pneg %p139
        $region86: #{attention_mnist_forward.1} parent=71 // pred_check_branch
          %498 = sbr.rel (%p496) target = $region88
        $region87: #{attention_mnist_forward.1} parent=71 // pred_region
          %500 = dma.done [#allocation10], 256
        $region88: #{attention_mnist_forward.1} parent=71 // pred_fallthru
          _
        // Predicated region
        $region89: #{attention_mnist_forward.1} parent=71 // pred_check
          %p501 = pneg %p160
        $region90: #{attention_mnist_forward.1} parent=71 // pred_check_branch
          %503 = sbr.rel (%p501) target = $region92
        $region91: #{attention_mnist_forward.1} parent=71 // pred_region
          %505 = dma.done [#allocation10], 32768
        $region92: #{attention_mnist_forward.1} parent=71 // pred_fallthru
          _
        // Predicated region
        $region93: #{attention_mnist_forward.1} parent=71 // pred_check
          %p506 = pneg %p202
        $region94: #{attention_mnist_forward.1} parent=71 // pred_check_branch
          %508 = sbr.rel (%p506) target = $region96
        $region95: #{attention_mnist_forward.1} parent=71 // pred_region
          %510 = dma.done [#allocation13], 8192
        $region96: #{attention_mnist_forward.1} parent=71 // pred_fallthru
          _
        // Predicated region
        $region97: #{attention_mnist_forward.1} parent=71 // pred_check
          %p511 = pneg %p223
        $region98: #{attention_mnist_forward.1} parent=71 // pred_check_branch
          %513 = sbr.rel (%p511) target = $region100
        $region99: #{attention_mnist_forward.1} parent=71 // pred_region
          %515 = dma.done [#allocation13], 16
        $region100: #{attention_mnist_forward.1} parent=71 // pred_fallthru
          _
        %s516 = sand.u32 %s42, 1
        %s517 = scalar_lea.sflag [#allocation5], %s516
        %s518 = sand.u32 %s42, 1
        %s519 = smul.addr %s518, 8
        %s520 = scalar_lea.vmem [#allocation4], %s519
        %p521 = pneg %p55
        %p522 = pneg %p52
        %p523 = pneg %p76
        %p524 = pneg %p73
        %p525 = pneg %p97
        %p526 = pneg %p94
        %p527 = pneg %p118
        %p528 = pneg %p115
        %p529 = pneg %p139
        %p530 = pneg %p136
        %p531 = pneg %p160
        %p532 = pneg %p157
        %p533 = pneg %p181
        %p534 = pneg %p178
        %p535 = pneg %p202
        %p536 = pneg %p199
        %p537 = pneg %p223
        %p538 = pneg %p220
        %p539 = pneg %p244
        %p540 = pneg %p241
        %p541 = pneg %p265
        %p542 = pneg %p262
        %p543 = pneg %p286
        %p544 = pneg %p283
        %p545 = pneg %p307
        %p546 = pneg %p304
        %p547 = pneg %p333
        %p548 = pneg %p330
        %p549 = scmp.lt.s32.totalorder %s34, 2
        %s550 = scalar_select %p549, %s34, 2
        %s551 = smul.addr %s550, 8
        %s552 = scalar_lea.vmem %s13, %s551
        %p553 = scmp.lt.s32.totalorder %s34, 2
        %s554 = scalar_select %p553, %s34, 2
        %s555 = smul.addr %s554, 8
        %s556 = scalar_lea.vmem %s13, %s555
        %v557 = vld [vmem:[%s480] sm:$0xff]
        %v558 = vld [vmem:[#allocation6] sm:$0xff]
        %v559 = vld [vmem:[#allocation6 + $0x8] sm:$0xff]
        %v560 = vld [vmem:[#allocation6 + $0x10] sm:$0xff]
        %v561 = vld [vmem:[#allocation6 + $0x18] sm:$0xff]
        %v562 = vld [vmem:[#allocation6 + $0x20] sm:$0xff]
        %v563 = vld [vmem:[#allocation6 + $0x28] sm:$0xff]
        %v564 = vld [vmem:[#allocation6 + $0x30] sm:$0xff]
        %v565 = vld [vmem:[#allocation6 + $0x38] sm:$0xff]
        %v566 = vld [vmem:[%s2] sm:$0xf]
        %v568 = vperm.slane %v566, 0
        %v569 = vperm.slane %v566, 1
        %v570 = vperm.slane %v566, 2
        %v571 = vperm.slane %v566, 3
        %vm576 = vcmask 130048
        %v578 = vsel %vm576, %v557, 0
        %580 = vmatpush.msra.mxu0 0.0
        %581 = vmatpush.msra.mxu0 0.0
        %582 = vmatpush.msra.mxu0 0.0
        %583 = vmatpush.msra.mxu0 0.0
        %584 = vmatpush.msra.mxu0 0.0
        %585 = vmatpush.msra.mxu0 0.0
        %586 = vmatpush.msra.mxu0 0.0
        %587 = vmatpush.msra.mxu0 0.0
        %588 = vmatpush.msra.mxu0 0.0
        %589 = vmatpush.msra.mxu0 0.0
        %590 = vmatpush.msra.mxu0 0.0
        %591 = vmatpush.msra.mxu0 0.0
        %592 = vmatpush.msra.mxu0 0.0
        %593 = vmatpush.msra.mxu0 0.0
        %594 = vmatpush.msra.mxu0 %v562
        %595 = vmatpush.msra.mxu0 %v558
        %596 = vmatmul.f32.gmra.mxu0 %v578
        %v597 = vpop.f32.mrf.mxu0
        %v598 = vadd.f32 %v568, %v597
        %599 = vdwg.mxu0
        %600 = vmatpush.msra.mxu0 0.0
        %601 = vmatpush.msra.mxu0 0.0
        %602 = vmatpush.msra.mxu0 0.0
        %603 = vmatpush.msra.mxu0 0.0
        %604 = vmatpush.msra.mxu0 0.0
        %605 = vmatpush.msra.mxu0 0.0
        %606 = vmatpush.msra.mxu0 0.0
        %607 = vmatpush.msra.mxu0 0.0
        %608 = vmatpush.msra.mxu0 0.0
        %609 = vmatpush.msra.mxu0 0.0
        %610 = vmatpush.msra.mxu0 0.0
        %611 = vmatpush.msra.mxu0 0.0
        %612 = vmatpush.msra.mxu0 0.0
        %613 = vmatpush.msra.mxu0 0.0
        %614 = vmatpush.msra.mxu0 %v563
        %615 = vmatpush.msra.mxu0 %v559
        %616 = vmatmul.f32.gmra.mxu0 %v578
        %v617 = vpop.f32.mrf.mxu0
        %v618 = vadd.f32 %v569, %v617
        %619 = vdwg.mxu0
        %620 = vmatpush.msra.mxu0 0.0
        %621 = vmatpush.msra.mxu0 0.0
        %622 = vmatpush.msra.mxu0 0.0
        %623 = vmatpush.msra.mxu0 0.0
        %624 = vmatpush.msra.mxu0 0.0
        %625 = vmatpush.msra.mxu0 0.0
        %626 = vmatpush.msra.mxu0 0.0
        %627 = vmatpush.msra.mxu0 0.0
        %628 = vmatpush.msra.mxu0 0.0
        %629 = vmatpush.msra.mxu0 0.0
        %630 = vmatpush.msra.mxu0 0.0
        %631 = vmatpush.msra.mxu0 0.0
        %632 = vmatpush.msra.mxu0 0.0
        %633 = vmatpush.msra.mxu0 0.0
        %634 = vmatpush.msra.mxu0 %v564
        %635 = vmatpush.msra.mxu0 %v560
        %636 = vmatmul.f32.gmra.mxu0 %v578
        %v637 = vpop.f32.mrf.mxu0
        %v638 = vadd.f32 %v570, %v637
        %639 = vdwg.mxu0
        %640 = vmatpush.msra.mxu0 0.0
        %641 = vmatpush.msra.mxu0 0.0
        %642 = vmatpush.msra.mxu0 0.0
        %643 = vmatpush.msra.mxu0 0.0
        %644 = vmatpush.msra.mxu0 0.0
        %645 = vmatpush.msra.mxu0 0.0
        %646 = vmatpush.msra.mxu0 0.0
        %647 = vmatpush.msra.mxu0 0.0
        %648 = vmatpush.msra.mxu0 0.0
        %649 = vmatpush.msra.mxu0 0.0
        %650 = vmatpush.msra.mxu0 0.0
        %651 = vmatpush.msra.mxu0 0.0
        %652 = vmatpush.msra.mxu0 0.0
        %653 = vmatpush.msra.mxu0 0.0
        %654 = vmatpush.msra.mxu0 %v565
        %655 = vmatpush.msra.mxu0 %v561
        %656 = vmatmul.f32.gmra.mxu0 %v578
        %v657 = vpop.f32.mrf.mxu0
        %v658 = vadd.f32 %v571, %v657
        %659 = vdwg.mxu0
        %v660 = vmax.f32 %v598, 0.0
        %v661 = vmax.f32 %v618, 0.0
        %v662 = vmax.f32 %v638, 0.0
        %v663 = vmax.f32 %v658, 0.0
        %v664 = vmax.f32 %v660, %v661
        %v665 = vmax.f32 %v662, %v663
        %v666 = vmax.f32 %v664, %v665
        %v667 = vld [vmem:[#allocation8] sm:$0xff]
        %v668 = vld [vmem:[#allocation8 + $0x8] sm:$0xff]
        %v669 = vld [vmem:[#allocation8 + $0x10] sm:$0xff]
        %v670 = vld [vmem:[#allocation8 + $0x18] sm:$0xff]
        %v671 = vld [vmem:[#allocation8 + $0x20] sm:$0xff]
        %v672 = vld [vmem:[#allocation8 + $0x28] sm:$0xff]
        %v673 = vld [vmem:[#allocation8 + $0x30] sm:$0xff]
        %v674 = vld [vmem:[#allocation8 + $0x38] sm:$0xff]
        %v675 = vld [vmem:[#allocation8 + $0x40] sm:$0xff]
        %v676 = vld [vmem:[#allocation8 + $0x48] sm:$0xff]
        %v677 = vld [vmem:[#allocation8 + $0x50] sm:$0xff]
        %v678 = vld [vmem:[#allocation8 + $0x58] sm:$0xff]
        %v679 = vld [vmem:[#allocation8 + $0x60] sm:$0xff]
        %v680 = vld [vmem:[#allocation8 + $0x68] sm:$0xff]
        %v681 = vld [vmem:[#allocation8 + $0x70] sm:$0xff]
        %v682 = vld [vmem:[#allocation8 + $0x78] sm:$0xff]
        %v683 = vld [vmem:[#allocation8 + $0x80] sm:$0xff]
        %v684 = vld [vmem:[#allocation8 + $0x88] sm:$0xff]
        %v685 = vld [vmem:[#allocation8 + $0x90] sm:$0xff]
        %v686 = vld [vmem:[#allocation8 + $0x98] sm:$0xff]
        %v687 = vld [vmem:[#allocation8 + $0xa0] sm:$0xff]
        %v688 = vld [vmem:[#allocation8 + $0xa8] sm:$0xff]
        %v689 = vld [vmem:[#allocation8 + $0xb0] sm:$0xff]
        %v690 = vld [vmem:[#allocation8 + $0xb8] sm:$0xff]
        %v691 = vld [vmem:[#allocation8 + $0xc0] sm:$0xff]
        %v692 = vld [vmem:[#allocation8 + $0xc8] sm:$0xff]
        %v693 = vld [vmem:[#allocation8 + $0xd0] sm:$0xff]
        %v694 = vld [vmem:[#allocation8 + $0xd8] sm:$0xff]
        %v695 = vld [vmem:[#allocation8 + $0xe0] sm:$0xff]
        %v696 = vld [vmem:[#allocation8 + $0xe8] sm:$0xff]
        %v697 = vld [vmem:[#allocation8 + $0xf0] sm:$0xff]
        %v698 = vld [vmem:[#allocation8 + $0xf8] sm:$0xff]
        %v699 = vld [vmem:[#allocation8 + $0x100] sm:$0xff]
        %v700 = vld [vmem:[#allocation8 + $0x108] sm:$0xff]
        %v701 = vld [vmem:[#allocation8 + $0x110] sm:$0xff]
        %v702 = vld [vmem:[#allocation8 + $0x118] sm:$0xff]
        %v703 = vld [vmem:[#allocation8 + $0x120] sm:$0xff]
        %v704 = vld [vmem:[#allocation8 + $0x128] sm:$0xff]
        %v705 = vld [vmem:[#allocation8 + $0x130] sm:$0xff]
        %v706 = vld [vmem:[#allocation8 + $0x138] sm:$0xff]
        %v707 = vld [vmem:[#allocation8 + $0x140] sm:$0xff]
        %v708 = vld [vmem:[#allocation8 + $0x148] sm:$0xff]
        %v709 = vld [vmem:[#allocation8 + $0x150] sm:$0xff]
        %v710 = vld [vmem:[#allocation8 + $0x158] sm:$0xff]
        %v711 = vld [vmem:[#allocation8 + $0x160] sm:$0xff]
        %v712 = vld [vmem:[#allocation8 + $0x168] sm:$0xff]
        %v713 = vld [vmem:[#allocation8 + $0x170] sm:$0xff]
        %v714 = vld [vmem:[#allocation8 + $0x178] sm:$0xff]
        %v715 = vld [vmem:[#allocation8 + $0x180] sm:$0xff]
        %v716 = vld [vmem:[#allocation8 + $0x188] sm:$0xff]
        %v717 = vld [vmem:[#allocation8 + $0x190] sm:$0xff]
        %v718 = vld [vmem:[#allocation8 + $0x198] sm:$0xff]
        %v719 = vld [vmem:[#allocation8 + $0x1a0] sm:$0xff]
        %v720 = vld [vmem:[#allocation8 + $0x1a8] sm:$0xff]
        %v721 = vld [vmem:[#allocation8 + $0x1b0] sm:$0xff]
        %v722 = vld [vmem:[#allocation8 + $0x1b8] sm:$0xff]
        %v723 = vld [vmem:[#allocation8 + $0x1c0] sm:$0xff]
        %v724 = vld [vmem:[#allocation8 + $0x1c8] sm:$0xff]
        %v725 = vld [vmem:[#allocation8 + $0x1d0] sm:$0xff]
        %v726 = vld [vmem:[#allocation8 + $0x1d8] sm:$0xff]
        %v727 = vld [vmem:[#allocation8 + $0x1e0] sm:$0xff]
        %v728 = vld [vmem:[#allocation8 + $0x1e8] sm:$0xff]
        %v729 = vld [vmem:[#allocation8 + $0x1f0] sm:$0xff]
        %v730 = vld [vmem:[#allocation8 + $0x1f8] sm:$0xff]
        %v731 = vld [vmem:[#allocation8 + $0x200] sm:$0xff]
        %v732 = vld [vmem:[#allocation8 + $0x208] sm:$0xff]
        %v733 = vld [vmem:[#allocation8 + $0x210] sm:$0xff]
        %v734 = vld [vmem:[#allocation8 + $0x218] sm:$0xff]
        %v735 = vld [vmem:[#allocation8 + $0x220] sm:$0xff]
        %v736 = vld [vmem:[#allocation8 + $0x228] sm:$0xff]
        %v737 = vld [vmem:[#allocation8 + $0x230] sm:$0xff]
        %v738 = vld [vmem:[#allocation8 + $0x238] sm:$0xff]
        %v739 = vld [vmem:[#allocation8 + $0x240] sm:$0xff]
        %v740 = vld [vmem:[#allocation8 + $0x248] sm:$0xff]
        %v741 = vld [vmem:[#allocation8 + $0x250] sm:$0xff]
        %v742 = vld [vmem:[#allocation8 + $0x258] sm:$0xff]
        %v743 = vld [vmem:[#allocation8 + $0x260] sm:$0xff]
        %v744 = vld [vmem:[#allocation8 + $0x268] sm:$0xff]
        %v745 = vld [vmem:[#allocation8 + $0x270] sm:$0xff]
        %v746 = vld [vmem:[#allocation8 + $0x278] sm:$0xff]
        %v747 = vld [vmem:[#allocation8 + $0x280] sm:$0xff]
        %v748 = vld [vmem:[#allocation8 + $0x288] sm:$0xff]
        %v749 = vld [vmem:[#allocation8 + $0x290] sm:$0xff]
        %v750 = vld [vmem:[#allocation8 + $0x298] sm:$0xff]
        %v751 = vld [vmem:[#allocation8 + $0x2a0] sm:$0xff]
        %v752 = vld [vmem:[#allocation8 + $0x2a8] sm:$0xff]
        %v753 = vld [vmem:[#allocation8 + $0x2b0] sm:$0xff]
        %v754 = vld [vmem:[#allocation8 + $0x2b8] sm:$0xff]
        %v755 = vld [vmem:[#allocation8 + $0x2c0] sm:$0xff]
        %v756 = vld [vmem:[#allocation8 + $0x2c8] sm:$0xff]
        %v757 = vld [vmem:[#allocation8 + $0x2d0] sm:$0xff]
        %v758 = vld [vmem:[#allocation8 + $0x2d8] sm:$0xff]
        %v759 = vld [vmem:[#allocation8 + $0x2e0] sm:$0xff]
        %v760 = vld [vmem:[#allocation8 + $0x2e8] sm:$0xff]
        %v761 = vld [vmem:[#allocation8 + $0x2f0] sm:$0xff]
        %v762 = vld [vmem:[#allocation8 + $0x2f8] sm:$0xff]
        %v763 = vld [vmem:[#allocation8 + $0x300] sm:$0xff]
        %v764 = vld [vmem:[#allocation8 + $0x308] sm:$0xff]
        %v765 = vld [vmem:[#allocation8 + $0x310] sm:$0xff]
        %v766 = vld [vmem:[#allocation8 + $0x318] sm:$0xff]
        %v767 = vld [vmem:[#allocation8 + $0x320] sm:$0xff]
        %v768 = vld [vmem:[#allocation8 + $0x328] sm:$0xff]
        %v769 = vld [vmem:[#allocation8 + $0x330] sm:$0xff]
        %v770 = vld [vmem:[#allocation8 + $0x338] sm:$0xff]
        %v771 = vld [vmem:[#allocation8 + $0x340] sm:$0xff]
        %v772 = vld [vmem:[#allocation8 + $0x348] sm:$0xff]
        %v773 = vld [vmem:[#allocation8 + $0x350] sm:$0xff]
        %v774 = vld [vmem:[#allocation8 + $0x358] sm:$0xff]
        %v775 = vld [vmem:[#allocation8 + $0x360] sm:$0xff]
        %v776 = vld [vmem:[#allocation8 + $0x368] sm:$0xff]
        %v777 = vld [vmem:[#allocation8 + $0x370] sm:$0xff]
        %v778 = vld [vmem:[#allocation8 + $0x378] sm:$0xff]
        %v779 = vld [vmem:[#allocation8 + $0x380] sm:$0xff]
        %v780 = vld [vmem:[#allocation8 + $0x388] sm:$0xff]
        %v781 = vld [vmem:[#allocation8 + $0x390] sm:$0xff]
        %v782 = vld [vmem:[#allocation8 + $0x398] sm:$0xff]
        %v783 = vld [vmem:[#allocation8 + $0x3a0] sm:$0xff]
        %v784 = vld [vmem:[#allocation8 + $0x3a8] sm:$0xff]
        %v785 = vld [vmem:[#allocation8 + $0x3b0] sm:$0xff]
        %v786 = vld [vmem:[#allocation8 + $0x3b8] sm:$0xff]
        %v787 = vld [vmem:[#allocation8 + $0x3c0] sm:$0xff]
        %v788 = vld [vmem:[#allocation8 + $0x3c8] sm:$0xff]
        %v789 = vld [vmem:[#allocation8 + $0x3d0] sm:$0xff]
        %v790 = vld [vmem:[#allocation8 + $0x3d8] sm:$0xff]
        %v791 = vld [vmem:[#allocation8 + $0x3e0] sm:$0xff]
        %v792 = vld [vmem:[#allocation8 + $0x3e8] sm:$0xff]
        %v793 = vld [vmem:[#allocation8 + $0x3f0] sm:$0xff]
        %v794 = vld [vmem:[#allocation8 + $0x3f8] sm:$0xff]
        %v795 = vld [vmem:[#allocation8 + $0x400] sm:$0xff]
        %v796 = vld [vmem:[#allocation8 + $0x408] sm:$0xff]
        %v797 = vld [vmem:[#allocation8 + $0x410] sm:$0xff]
        %v798 = vld [vmem:[#allocation8 + $0x418] sm:$0xff]
        %v799 = vld [vmem:[#allocation8 + $0x420] sm:$0xff]
        %v800 = vld [vmem:[#allocation8 + $0x428] sm:$0xff]
        %v801 = vld [vmem:[#allocation8 + $0x430] sm:$0xff]
        %v802 = vld [vmem:[#allocation8 + $0x438] sm:$0xff]
        %v803 = vld [vmem:[#allocation8 + $0x440] sm:$0xff]
        %v804 = vld [vmem:[#allocation8 + $0x448] sm:$0xff]
        %v805 = vld [vmem:[#allocation8 + $0x450] sm:$0xff]
        %v806 = vld [vmem:[#allocation8 + $0x458] sm:$0xff]
        %v807 = vld [vmem:[#allocation8 + $0x460] sm:$0xff]
        %v808 = vld [vmem:[#allocation8 + $0x468] sm:$0xff]
        %v809 = vld [vmem:[#allocation8 + $0x470] sm:$0xff]
        %v810 = vld [vmem:[#allocation8 + $0x478] sm:$0xff]
        %v811 = vld [vmem:[#allocation8 + $0x480] sm:$0xff]
        %v812 = vld [vmem:[#allocation8 + $0x488] sm:$0xff]
        %v813 = vld [vmem:[#allocation8 + $0x490] sm:$0xff]
        %v814 = vld [vmem:[#allocation8 + $0x498] sm:$0xff]
        %v815 = vld [vmem:[#allocation8 + $0x4a0] sm:$0xff]
        %v816 = vld [vmem:[#allocation8 + $0x4a8] sm:$0xff]
        %v817 = vld [vmem:[#allocation8 + $0x4b0] sm:$0xff]
        %v818 = vld [vmem:[#allocation8 + $0x4b8] sm:$0xff]
        %v819 = vld [vmem:[#allocation8 + $0x4c0] sm:$0xff]
        %v820 = vld [vmem:[#allocation8 + $0x4c8] sm:$0xff]
        %v821 = vld [vmem:[#allocation8 + $0x4d0] sm:$0xff]
        %v822 = vld [vmem:[#allocation8 + $0x4d8] sm:$0xff]
        %v823 = vld [vmem:[#allocation8 + $0x4e0] sm:$0xff]
        %v824 = vld [vmem:[#allocation8 + $0x4e8] sm:$0xff]
        %v825 = vld [vmem:[#allocation8 + $0x4f0] sm:$0xff]
        %v826 = vld [vmem:[#allocation8 + $0x4f8] sm:$0xff]
        %v827 = vld [vmem:[#allocation8 + $0x500] sm:$0xff]
        %v828 = vld [vmem:[#allocation8 + $0x508] sm:$0xff]
        %v829 = vld [vmem:[#allocation8 + $0x510] sm:$0xff]
        %v830 = vld [vmem:[#allocation8 + $0x518] sm:$0xff]
        %v831 = vld [vmem:[#allocation8 + $0x520] sm:$0xff]
        %v832 = vld [vmem:[#allocation8 + $0x528] sm:$0xff]
        %v833 = vld [vmem:[#allocation8 + $0x530] sm:$0xff]
        %v834 = vld [vmem:[#allocation8 + $0x538] sm:$0xff]
        %v835 = vld [vmem:[#allocation8 + $0x540] sm:$0xff]
        %v836 = vld [vmem:[#allocation8 + $0x548] sm:$0xff]
        %v837 = vld [vmem:[#allocation8 + $0x550] sm:$0xff]
        %v838 = vld [vmem:[#allocation8 + $0x558] sm:$0xff]
        %v839 = vld [vmem:[#allocation8 + $0x560] sm:$0xff]
        %v840 = vld [vmem:[#allocation8 + $0x568] sm:$0xff]
        %v841 = vld [vmem:[#allocation8 + $0x570] sm:$0xff]
        %v842 = vld [vmem:[#allocation8 + $0x578] sm:$0xff]
        %v843 = vld [vmem:[#allocation8 + $0x580] sm:$0xff]
        %v844 = vld [vmem:[#allocation8 + $0x588] sm:$0xff]
        %v845 = vld [vmem:[#allocation8 + $0x590] sm:$0xff]
        %v846 = vld [vmem:[#allocation8 + $0x598] sm:$0xff]
        %v847 = vld [vmem:[#allocation8 + $0x5a0] sm:$0xff]
        %v848 = vld [vmem:[#allocation8 + $0x5a8] sm:$0xff]
        %v849 = vld [vmem:[#allocation8 + $0x5b0] sm:$0xff]
        %v850 = vld [vmem:[#allocation8 + $0x5b8] sm:$0xff]
        %v851 = vld [vmem:[#allocation8 + $0x5c0] sm:$0xff]
        %v852 = vld [vmem:[#allocation8 + $0x5c8] sm:$0xff]
        %v853 = vld [vmem:[#allocation8 + $0x5d0] sm:$0xff]
        %v854 = vld [vmem:[#allocation8 + $0x5d8] sm:$0xff]
        %v855 = vld [vmem:[#allocation8 + $0x5e0] sm:$0xff]
        %v856 = vld [vmem:[#allocation8 + $0x5e8] sm:$0xff]
        %v857 = vld [vmem:[#allocation8 + $0x5f0] sm:$0xff]
        %v858 = vld [vmem:[#allocation8 + $0x5f8] sm:$0xff]
        %v859 = vld [vmem:[#allocation8 + $0x600] sm:$0xff]
        %v860 = vld [vmem:[#allocation8 + $0x608] sm:$0xff]
        %v861 = vld [vmem:[#allocation8 + $0x610] sm:$0xff]
        %v862 = vld [vmem:[#allocation8 + $0x618] sm:$0xff]
        %v863 = vld [vmem:[#allocation8 + $0x620] sm:$0xff]
        %v864 = vld [vmem:[#allocation8 + $0x628] sm:$0xff]
        %v865 = vld [vmem:[#allocation8 + $0x630] sm:$0xff]
        %v866 = vld [vmem:[#allocation8 + $0x638] sm:$0xff]
        %v867 = vld [vmem:[#allocation8 + $0x640] sm:$0xff]
        %v868 = vld [vmem:[#allocation8 + $0x648] sm:$0xff]
        %v869 = vld [vmem:[#allocation8 + $0x650] sm:$0xff]
        %v870 = vld [vmem:[#allocation8 + $0x658] sm:$0xff]
        %v871 = vld [vmem:[#allocation8 + $0x660] sm:$0xff]
        %v872 = vld [vmem:[#allocation8 + $0x668] sm:$0xff]
        %v873 = vld [vmem:[#allocation8 + $0x670] sm:$0xff]
        %v874 = vld [vmem:[#allocation8 + $0x678] sm:$0xff]
        %v875 = vld [vmem:[#allocation8 + $0x680] sm:$0xff]
        %v876 = vld [vmem:[#allocation8 + $0x688] sm:$0xff]
        %v877 = vld [vmem:[#allocation8 + $0x690] sm:$0xff]
        %v878 = vld [vmem:[#allocation8 + $0x698] sm:$0xff]
        %v879 = vld [vmem:[#allocation8 + $0x6a0] sm:$0xff]
        %v880 = vld [vmem:[#allocation8 + $0x6a8] sm:$0xff]
        %v881 = vld [vmem:[#allocation8 + $0x6b0] sm:$0xff]
        %v882 = vld [vmem:[#allocation8 + $0x6b8] sm:$0xff]
        %v883 = vld [vmem:[#allocation8 + $0x6c0] sm:$0xff]
        %v884 = vld [vmem:[#allocation8 + $0x6c8] sm:$0xff]
        %v885 = vld [vmem:[#allocation8 + $0x6d0] sm:$0xff]
        %v886 = vld [vmem:[#allocation8 + $0x6d8] sm:$0xff]
        %v887 = vld [vmem:[#allocation8 + $0x6e0] sm:$0xff]
        %v888 = vld [vmem:[#allocation8 + $0x6e8] sm:$0xff]
        %v889 = vld [vmem:[#allocation8 + $0x6f0] sm:$0xff]
        %v890 = vld [vmem:[#allocation8 + $0x6f8] sm:$0xff]
        %v891 = vld [vmem:[#allocation8 + $0x700] sm:$0xff]
        %v892 = vld [vmem:[#allocation8 + $0x708] sm:$0xff]
        %v893 = vld [vmem:[#allocation8 + $0x710] sm:$0xff]
        %v894 = vld [vmem:[#allocation8 + $0x718] sm:$0xff]
        %v895 = vld [vmem:[#allocation8 + $0x720] sm:$0xff]
        %v896 = vld [vmem:[#allocation8 + $0x728] sm:$0xff]
        %v897 = vld [vmem:[#allocation8 + $0x730] sm:$0xff]
        %v898 = vld [vmem:[#allocation8 + $0x738] sm:$0xff]
        %v899 = vld [vmem:[#allocation8 + $0x740] sm:$0xff]
        %v900 = vld [vmem:[#allocation8 + $0x748] sm:$0xff]
        %v901 = vld [vmem:[#allocation8 + $0x750] sm:$0xff]
        %v902 = vld [vmem:[#allocation8 + $0x758] sm:$0xff]
        %v903 = vld [vmem:[#allocation8 + $0x760] sm:$0xff]
        %v904 = vld [vmem:[#allocation8 + $0x768] sm:$0xff]
        %v905 = vld [vmem:[#allocation8 + $0x770] sm:$0xff]
        %v906 = vld [vmem:[#allocation8 + $0x778] sm:$0xff]
        %v907 = vld [vmem:[#allocation8 + $0x780] sm:$0xff]
        %v908 = vld [vmem:[#allocation8 + $0x788] sm:$0xff]
        %v909 = vld [vmem:[#allocation8 + $0x790] sm:$0xff]
        %v910 = vld [vmem:[#allocation8 + $0x798] sm:$0xff]
        %v911 = vld [vmem:[#allocation8 + $0x7a0] sm:$0xff]
        %v912 = vld [vmem:[#allocation8 + $0x7a8] sm:$0xff]
        %v913 = vld [vmem:[#allocation8 + $0x7b0] sm:$0xff]
        %v914 = vld [vmem:[#allocation8 + $0x7b8] sm:$0xff]
        %v915 = vld [vmem:[#allocation8 + $0x7c0] sm:$0xff]
        %v916 = vld [vmem:[#allocation8 + $0x7c8] sm:$0xff]
        %v917 = vld [vmem:[#allocation8 + $0x7d0] sm:$0xff]
        %v918 = vld [vmem:[#allocation8 + $0x7d8] sm:$0xff]
        %v919 = vld [vmem:[#allocation8 + $0x7e0] sm:$0xff]
        %v920 = vld [vmem:[#allocation8 + $0x7e8] sm:$0xff]
        %v921 = vld [vmem:[#allocation8 + $0x7f0] sm:$0xff]
        %v922 = vld [vmem:[#allocation8 + $0x7f8] sm:$0xff]
        %v923 = vld [vmem:[#allocation9] sm:$0xff]
        %v924 = vld [vmem:[#allocation9 + $0x8] sm:$0xff]
        %v927 = vperm.slane %v923, 0
        %v928 = vperm.slane %v923, 1
        %v929 = vperm.slane %v923, 2
        %v930 = vperm.slane %v923, 3
        %v931 = vperm.slane %v923, 4
        %v932 = vperm.slane %v923, 5
        %v933 = vperm.slane %v923, 6
        %v934 = vperm.slane %v923, 7
        %v935 = vperm.slane %v924, 0
        %v936 = vperm.slane %v924, 1
        %v937 = vperm.slane %v924, 2
        %v938 = vperm.slane %v924, 3
        %v939 = vperm.slane %v924, 4
        %v940 = vperm.slane %v924, 5
        %v941 = vperm.slane %v924, 6
        %v942 = vperm.slane %v924, 7
        %959 = vmatpush.msra.mxu0 %v907
        %960 = vmatpush.msra.mxu0 %v891
        %961 = vmatpush.msra.mxu0 %v875
        %962 = vmatpush.msra.mxu0 %v859
        %963 = vmatpush.msra.mxu0 %v843
        %964 = vmatpush.msra.mxu0 %v827
        %965 = vmatpush.msra.mxu0 %v811
        %966 = vmatpush.msra.mxu0 %v795
        %967 = vmatpush.msra.mxu0 %v779
        %968 = vmatpush.msra.mxu0 %v763
        %969 = vmatpush.msra.mxu0 %v747
        %970 = vmatpush.msra.mxu0 %v731
        %971 = vmatpush.msra.mxu0 %v715
        %972 = vmatpush.msra.mxu0 %v699
        %973 = vmatpush.msra.mxu0 %v683
        %974 = vmatpush.msra.mxu0 %v667
        %975 = vmatmul.f32.gmra.mxu0 %v666
        %v976 = vpop.f32.mrf.mxu0
        %v977 = vadd.f32 %v927, %v976
        %978 = vdwg.mxu0
        %979 = vmatpush.msra.mxu0 %v908
        %980 = vmatpush.msra.mxu0 %v892
        %981 = vmatpush.msra.mxu0 %v876
        %982 = vmatpush.msra.mxu0 %v860
        %983 = vmatpush.msra.mxu0 %v844
        %984 = vmatpush.msra.mxu0 %v828
        %985 = vmatpush.msra.mxu0 %v812
        %986 = vmatpush.msra.mxu0 %v796
        %987 = vmatpush.msra.mxu0 %v780
        %988 = vmatpush.msra.mxu0 %v764
        %989 = vmatpush.msra.mxu0 %v748
        %990 = vmatpush.msra.mxu0 %v732
        %991 = vmatpush.msra.mxu0 %v716
        %992 = vmatpush.msra.mxu0 %v700
        %993 = vmatpush.msra.mxu0 %v684
        %994 = vmatpush.msra.mxu0 %v668
        %995 = vmatmul.f32.gmra.mxu0 %v666
        %v996 = vpop.f32.mrf.mxu0
        %v997 = vadd.f32 %v928, %v996
        %998 = vdwg.mxu0
        %999 = vmatpush.msra.mxu0 %v909
        %1000 = vmatpush.msra.mxu0 %v893
        %1001 = vmatpush.msra.mxu0 %v877
        %1002 = vmatpush.msra.mxu0 %v861
        %1003 = vmatpush.msra.mxu0 %v845
        %1004 = vmatpush.msra.mxu0 %v829
        %1005 = vmatpush.msra.mxu0 %v813
        %1006 = vmatpush.msra.mxu0 %v797
        %1007 = vmatpush.msra.mxu0 %v781
        %1008 = vmatpush.msra.mxu0 %v765
        %1009 = vmatpush.msra.mxu0 %v749
        %1010 = vmatpush.msra.mxu0 %v733
        %1011 = vmatpush.msra.mxu0 %v717
        %1012 = vmatpush.msra.mxu0 %v701
        %1013 = vmatpush.msra.mxu0 %v685
        %1014 = vmatpush.msra.mxu0 %v669
        %1015 = vmatmul.f32.gmra.mxu0 %v666
        %v1016 = vpop.f32.mrf.mxu0
        %v1017 = vadd.f32 %v929, %v1016
        %1018 = vdwg.mxu0
        %1019 = vmatpush.msra.mxu0 %v910
        %1020 = vmatpush.msra.mxu0 %v894
        %1021 = vmatpush.msra.mxu0 %v878
        %1022 = vmatpush.msra.mxu0 %v862
        %1023 = vmatpush.msra.mxu0 %v846
        %1024 = vmatpush.msra.mxu0 %v830
        %1025 = vmatpush.msra.mxu0 %v814
        %1026 = vmatpush.msra.mxu0 %v798
        %1027 = vmatpush.msra.mxu0 %v782
        %1028 = vmatpush.msra.mxu0 %v766
        %1029 = vmatpush.msra.mxu0 %v750
        %1030 = vmatpush.msra.mxu0 %v734
        %1031 = vmatpush.msra.mxu0 %v718
        %1032 = vmatpush.msra.mxu0 %v702
        %1033 = vmatpush.msra.mxu0 %v686
        %1034 = vmatpush.msra.mxu0 %v670
        %1035 = vmatmul.f32.gmra.mxu0 %v666
        %v1036 = vpop.f32.mrf.mxu0
        %v1037 = vadd.f32 %v930, %v1036
        %1038 = vdwg.mxu0
        %1039 = vmatpush.msra.mxu0 %v911
        %1040 = vmatpush.msra.mxu0 %v895
        %1041 = vmatpush.msra.mxu0 %v879
        %1042 = vmatpush.msra.mxu0 %v863
        %1043 = vmatpush.msra.mxu0 %v847
        %1044 = vmatpush.msra.mxu0 %v831
        %1045 = vmatpush.msra.mxu0 %v815
        %1046 = vmatpush.msra.mxu0 %v799
        %1047 = vmatpush.msra.mxu0 %v783
        %1048 = vmatpush.msra.mxu0 %v767
        %1049 = vmatpush.msra.mxu0 %v751
        %1050 = vmatpush.msra.mxu0 %v735
        %1051 = vmatpush.msra.mxu0 %v719
        %1052 = vmatpush.msra.mxu0 %v703
        %1053 = vmatpush.msra.mxu0 %v687
        %1054 = vmatpush.msra.mxu0 %v671
        %1055 = vmatmul.f32.gmra.mxu0 %v666
        %v1056 = vpop.f32.mrf.mxu0
        %v1057 = vadd.f32 %v931, %v1056
        %1058 = vdwg.mxu0
        %1059 = vmatpush.msra.mxu0 %v912
        %1060 = vmatpush.msra.mxu0 %v896
        %1061 = vmatpush.msra.mxu0 %v880
        %1062 = vmatpush.msra.mxu0 %v864
        %1063 = vmatpush.msra.mxu0 %v848
        %1064 = vmatpush.msra.mxu0 %v832
        %1065 = vmatpush.msra.mxu0 %v816
        %1066 = vmatpush.msra.mxu0 %v800
        %1067 = vmatpush.msra.mxu0 %v784
        %1068 = vmatpush.msra.mxu0 %v768
        %1069 = vmatpush.msra.mxu0 %v752
        %1070 = vmatpush.msra.mxu0 %v736
        %1071 = vmatpush.msra.mxu0 %v720
        %1072 = vmatpush.msra.mxu0 %v704
        %1073 = vmatpush.msra.mxu0 %v688
        %1074 = vmatpush.msra.mxu0 %v672
        %1075 = vmatmul.f32.gmra.mxu0 %v666
        %v1076 = vpop.f32.mrf.mxu0
        %v1077 = vadd.f32 %v932, %v1076
        %1078 = vdwg.mxu0
        %1079 = vmatpush.msra.mxu0 %v913
        %1080 = vmatpush.msra.mxu0 %v897
        %1081 = vmatpush.msra.mxu0 %v881
        %1082 = vmatpush.msra.mxu0 %v865
        %1083 = vmatpush.msra.mxu0 %v849
        %1084 = vmatpush.msra.mxu0 %v833
        %1085 = vmatpush.msra.mxu0 %v817
        %1086 = vmatpush.msra.mxu0 %v801
        %1087 = vmatpush.msra.mxu0 %v785
        %1088 = vmatpush.msra.mxu0 %v769
        %1089 = vmatpush.msra.mxu0 %v753
        %1090 = vmatpush.msra.mxu0 %v737
        %1091 = vmatpush.msra.mxu0 %v721
        %1092 = vmatpush.msra.mxu0 %v705
        %1093 = vmatpush.msra.mxu0 %v689
        %1094 = vmatpush.msra.mxu0 %v673
        %1095 = vmatmul.f32.gmra.mxu0 %v666
        %v1096 = vpop.f32.mrf.mxu0
        %v1097 = vadd.f32 %v933, %v1096
        %1098 = vdwg.mxu0
        %1099 = vmatpush.msra.mxu0 %v914
        %1100 = vmatpush.msra.mxu0 %v898
        %1101 = vmatpush.msra.mxu0 %v882
        %1102 = vmatpush.msra.mxu0 %v866
        %1103 = vmatpush.msra.mxu0 %v850
        %1104 = vmatpush.msra.mxu0 %v834
        %1105 = vmatpush.msra.mxu0 %v818
        %1106 = vmatpush.msra.mxu0 %v802
        %1107 = vmatpush.msra.mxu0 %v786
        %1108 = vmatpush.msra.mxu0 %v770
        %1109 = vmatpush.msra.mxu0 %v754
        %1110 = vmatpush.msra.mxu0 %v738
        %1111 = vmatpush.msra.mxu0 %v722
        %1112 = vmatpush.msra.mxu0 %v706
        %1113 = vmatpush.msra.mxu0 %v690
        %1114 = vmatpush.msra.mxu0 %v674
        %1115 = vmatmul.f32.gmra.mxu0 %v666
        %v1116 = vpop.f32.mrf.mxu0
        %v1117 = vadd.f32 %v934, %v1116
        %1118 = vdwg.mxu0
        %1119 = vmatpush.msra.mxu0 %v915
        %1120 = vmatpush.msra.mxu0 %v899
        %1121 = vmatpush.msra.mxu0 %v883
        %1122 = vmatpush.msra.mxu0 %v867
        %1123 = vmatpush.msra.mxu0 %v851
        %1124 = vmatpush.msra.mxu0 %v835
        %1125 = vmatpush.msra.mxu0 %v819
        %1126 = vmatpush.msra.mxu0 %v803
        %1127 = vmatpush.msra.mxu0 %v787
        %1128 = vmatpush.msra.mxu0 %v771
        %1129 = vmatpush.msra.mxu0 %v755
        %1130 = vmatpush.msra.mxu0 %v739
        %1131 = vmatpush.msra.mxu0 %v723
        %1132 = vmatpush.msra.mxu0 %v707
        %1133 = vmatpush.msra.mxu0 %v691
        %1134 = vmatpush.msra.mxu0 %v675
        %1135 = vmatmul.f32.gmra.mxu0 %v666
        %v1136 = vpop.f32.mrf.mxu0
        %v1137 = vadd.f32 %v935, %v1136
        %1138 = vdwg.mxu0
        %1139 = vmatpush.msra.mxu0 %v916
        %1140 = vmatpush.msra.mxu0 %v900
        %1141 = vmatpush.msra.mxu0 %v884
        %1142 = vmatpush.msra.mxu0 %v868
        %1143 = vmatpush.msra.mxu0 %v852
        %1144 = vmatpush.msra.mxu0 %v836
        %1145 = vmatpush.msra.mxu0 %v820
        %1146 = vmatpush.msra.mxu0 %v804
        %1147 = vmatpush.msra.mxu0 %v788
        %1148 = vmatpush.msra.mxu0 %v772
        %1149 = vmatpush.msra.mxu0 %v756
        %1150 = vmatpush.msra.mxu0 %v740
        %1151 = vmatpush.msra.mxu0 %v724
        %1152 = vmatpush.msra.mxu0 %v708
        %1153 = vmatpush.msra.mxu0 %v692
        %1154 = vmatpush.msra.mxu0 %v676
        %1155 = vmatmul.f32.gmra.mxu0 %v666
        %v1156 = vpop.f32.mrf.mxu0
        %v1157 = vadd.f32 %v936, %v1156
        %1158 = vdwg.mxu0
        %1159 = vmatpush.msra.mxu0 %v917
        %1160 = vmatpush.msra.mxu0 %v901
        %1161 = vmatpush.msra.mxu0 %v885
        %1162 = vmatpush.msra.mxu0 %v869
        %1163 = vmatpush.msra.mxu0 %v853
        %1164 = vmatpush.msra.mxu0 %v837
        %1165 = vmatpush.msra.mxu0 %v821
        %1166 = vmatpush.msra.mxu0 %v805
        %1167 = vmatpush.msra.mxu0 %v789
        %1168 = vmatpush.msra.mxu0 %v773
        %1169 = vmatpush.msra.mxu0 %v757
        %1170 = vmatpush.msra.mxu0 %v741
        %1171 = vmatpush.msra.mxu0 %v725
        %1172 = vmatpush.msra.mxu0 %v709
        %1173 = vmatpush.msra.mxu0 %v693
        %1174 = vmatpush.msra.mxu0 %v677
        %1175 = vmatmul.f32.gmra.mxu0 %v666
        %v1176 = vpop.f32.mrf.mxu0
        %v1177 = vadd.f32 %v937, %v1176
        %1178 = vdwg.mxu0
        %1179 = vmatpush.msra.mxu0 %v918
        %1180 = vmatpush.msra.mxu0 %v902
        %1181 = vmatpush.msra.mxu0 %v886
        %1182 = vmatpush.msra.mxu0 %v870
        %1183 = vmatpush.msra.mxu0 %v854
        %1184 = vmatpush.msra.mxu0 %v838
        %1185 = vmatpush.msra.mxu0 %v822
        %1186 = vmatpush.msra.mxu0 %v806
        %1187 = vmatpush.msra.mxu0 %v790
        %1188 = vmatpush.msra.mxu0 %v774
        %1189 = vmatpush.msra.mxu0 %v758
        %1190 = vmatpush.msra.mxu0 %v742
        %1191 = vmatpush.msra.mxu0 %v726
        %1192 = vmatpush.msra.mxu0 %v710
        %1193 = vmatpush.msra.mxu0 %v694
        %1194 = vmatpush.msra.mxu0 %v678
        %1195 = vmatmul.f32.gmra.mxu0 %v666
        %v1196 = vpop.f32.mrf.mxu0
        %v1197 = vadd.f32 %v938, %v1196
        %1198 = vdwg.mxu0
        %1199 = vmatpush.msra.mxu0 %v919
        %1200 = vmatpush.msra.mxu0 %v903
        %1201 = vmatpush.msra.mxu0 %v887
        %1202 = vmatpush.msra.mxu0 %v871
        %1203 = vmatpush.msra.mxu0 %v855
        %1204 = vmatpush.msra.mxu0 %v839
        %1205 = vmatpush.msra.mxu0 %v823
        %1206 = vmatpush.msra.mxu0 %v807
        %1207 = vmatpush.msra.mxu0 %v791
        %1208 = vmatpush.msra.mxu0 %v775
        %1209 = vmatpush.msra.mxu0 %v759
        %1210 = vmatpush.msra.mxu0 %v743
        %1211 = vmatpush.msra.mxu0 %v727
        %1212 = vmatpush.msra.mxu0 %v711
        %1213 = vmatpush.msra.mxu0 %v695
        %1214 = vmatpush.msra.mxu0 %v679
        %1215 = vmatmul.f32.gmra.mxu0 %v666
        %v1216 = vpop.f32.mrf.mxu0
        %v1217 = vadd.f32 %v939, %v1216
        %1218 = vdwg.mxu0
        %1219 = vmatpush.msra.mxu0 %v920
        %1220 = vmatpush.msra.mxu0 %v904
        %1221 = vmatpush.msra.mxu0 %v888
        %1222 = vmatpush.msra.mxu0 %v872
        %1223 = vmatpush.msra.mxu0 %v856
        %1224 = vmatpush.msra.mxu0 %v840
        %1225 = vmatpush.msra.mxu0 %v824
        %1226 = vmatpush.msra.mxu0 %v808
        %1227 = vmatpush.msra.mxu0 %v792
        %1228 = vmatpush.msra.mxu0 %v776
        %1229 = vmatpush.msra.mxu0 %v760
        %1230 = vmatpush.msra.mxu0 %v744
        %1231 = vmatpush.msra.mxu0 %v728
        %1232 = vmatpush.msra.mxu0 %v712
        %1233 = vmatpush.msra.mxu0 %v696
        %1234 = vmatpush.msra.mxu0 %v680
        %1235 = vmatmul.f32.gmra.mxu0 %v666
        %v1236 = vpop.f32.mrf.mxu0
        %v1237 = vadd.f32 %v940, %v1236
        %1238 = vdwg.mxu0
        %1239 = vmatpush.msra.mxu0 %v921
        %1240 = vmatpush.msra.mxu0 %v905
        %1241 = vmatpush.msra.mxu0 %v889
        %1242 = vmatpush.msra.mxu0 %v873
        %1243 = vmatpush.msra.mxu0 %v857
        %1244 = vmatpush.msra.mxu0 %v841
        %1245 = vmatpush.msra.mxu0 %v825
        %1246 = vmatpush.msra.mxu0 %v809
        %1247 = vmatpush.msra.mxu0 %v793
        %1248 = vmatpush.msra.mxu0 %v777
        %1249 = vmatpush.msra.mxu0 %v761
        %1250 = vmatpush.msra.mxu0 %v745
        %1251 = vmatpush.msra.mxu0 %v729
        %1252 = vmatpush.msra.mxu0 %v713
        %1253 = vmatpush.msra.mxu0 %v697
        %1254 = vmatpush.msra.mxu0 %v681
        %1255 = vmatmul.f32.gmra.mxu0 %v666
        %v1256 = vpop.f32.mrf.mxu0
        %v1257 = vadd.f32 %v941, %v1256
        %1258 = vdwg.mxu0
        %1259 = vmatpush.msra.mxu0 %v922
        %1260 = vmatpush.msra.mxu0 %v906
        %1261 = vmatpush.msra.mxu0 %v890
        %1262 = vmatpush.msra.mxu0 %v874
        %1263 = vmatpush.msra.mxu0 %v858
        %1264 = vmatpush.msra.mxu0 %v842
        %1265 = vmatpush.msra.mxu0 %v826
        %1266 = vmatpush.msra.mxu0 %v810
        %1267 = vmatpush.msra.mxu0 %v794
        %1268 = vmatpush.msra.mxu0 %v778
        %1269 = vmatpush.msra.mxu0 %v762
        %1270 = vmatpush.msra.mxu0 %v746
        %1271 = vmatpush.msra.mxu0 %v730
        %1272 = vmatpush.msra.mxu0 %v714
        %1273 = vmatpush.msra.mxu0 %v698
        %1274 = vmatpush.msra.mxu0 %v682
        %1275 = vmatmul.f32.gmra.mxu0 %v666
        %v1276 = vpop.f32.mrf.mxu0
        %v1277 = vadd.f32 %v942, %v1276
        %1278 = vdwg.mxu0
        %v1279 = vmax.f32 %v977, 0.0
        %v1280 = vmax.f32 %v997, 0.0
        %v1281 = vmax.f32 %v1017, 0.0
        %v1282 = vmax.f32 %v1037, 0.0
        %v1283 = vmax.f32 %v1057, 0.0
        %v1284 = vmax.f32 %v1077, 0.0
        %v1285 = vmax.f32 %v1097, 0.0
        %v1286 = vmax.f32 %v1117, 0.0
        %v1287 = vmax.f32 %v1137, 0.0
        %v1288 = vmax.f32 %v1157, 0.0
        %v1289 = vmax.f32 %v1177, 0.0
        %v1290 = vmax.f32 %v1197, 0.0
        %v1291 = vmax.f32 %v1217, 0.0
        %v1292 = vmax.f32 %v1237, 0.0
        %v1293 = vmax.f32 %v1257, 0.0
        %v1294 = vmax.f32 %v1277, 0.0
        %v1295 = vmax.f32 %v1279, %v1283
        %v1296 = vmax.f32 %v1280, %v1284
        %v1297 = vmax.f32 %v1281, %v1285
        %v1298 = vmax.f32 %v1282, %v1286
        %v1299 = vmax.f32 %v1287, %v1291
        %v1300 = vmax.f32 %v1288, %v1292
        %v1301 = vmax.f32 %v1289, %v1293
        %v1302 = vmax.f32 %v1290, %v1294
        %v1303 = vmax.f32 %v1295, %v1299
        %v1304 = vmax.f32 %v1296, %v1300
        %v1305 = vmax.f32 %v1297, %v1301
        %v1306 = vmax.f32 %v1298, %v1302
        %v1307 = vld [vmem:[#allocation11] sm:$0xff]
        %v1308 = vld [vmem:[#allocation11 + $0x8] sm:$0xff]
        %v1309 = vld [vmem:[#allocation11 + $0x10] sm:$0xff]
        %v1310 = vld [vmem:[#allocation11 + $0x18] sm:$0xff]
        %v1311 = vld [vmem:[#allocation11 + $0x20] sm:$0xff]
        %v1312 = vld [vmem:[#allocation11 + $0x28] sm:$0xff]
        %v1313 = vld [vmem:[#allocation11 + $0x30] sm:$0xff]
        %v1314 = vld [vmem:[#allocation11 + $0x38] sm:$0xff]
        %v1315 = vld [vmem:[#allocation11 + $0x40] sm:$0xff]
        %v1316 = vld [vmem:[#allocation11 + $0x48] sm:$0xff]
        %v1317 = vld [vmem:[#allocation11 + $0x50] sm:$0xff]
        %v1318 = vld [vmem:[#allocation11 + $0x58] sm:$0xff]
        %v1319 = vld [vmem:[#allocation11 + $0x60] sm:$0xff]
        %v1320 = vld [vmem:[#allocation11 + $0x68] sm:$0xff]
        %v1321 = vld [vmem:[#allocation11 + $0x70] sm:$0xff]
        %v1322 = vld [vmem:[#allocation11 + $0x78] sm:$0xff]
        %v1323 = vld [vmem:[#allocation11 + $0x80] sm:$0xff]
        %v1324 = vld [vmem:[#allocation11 + $0x88] sm:$0xff]
        %v1325 = vld [vmem:[#allocation11 + $0x90] sm:$0xff]
        %v1326 = vld [vmem:[#allocation11 + $0x98] sm:$0xff]
        %v1327 = vld [vmem:[#allocation11 + $0xa0] sm:$0xff]
        %v1328 = vld [vmem:[#allocation11 + $0xa8] sm:$0xff]
        %v1329 = vld [vmem:[#allocation11 + $0xb0] sm:$0xff]
        %v1330 = vld [vmem:[#allocation11 + $0xb8] sm:$0xff]
        %v1331 = vld [vmem:[#allocation11 + $0xc0] sm:$0xff]
        %v1332 = vld [vmem:[#allocation11 + $0xc8] sm:$0xff]
        %v1333 = vld [vmem:[#allocation11 + $0xd0] sm:$0xff]
        %v1334 = vld [vmem:[#allocation11 + $0xd8] sm:$0xff]
        %v1335 = vld [vmem:[#allocation11 + $0xe0] sm:$0xff]
        %v1336 = vld [vmem:[#allocation11 + $0xe8] sm:$0xff]
        %v1337 = vld [vmem:[#allocation11 + $0xf0] sm:$0xff]
        %v1338 = vld [vmem:[#allocation11 + $0xf8] sm:$0xff]
        %v1339 = vld [vmem:[#allocation11 + $0x100] sm:$0xff]
        %v1340 = vld [vmem:[#allocation11 + $0x108] sm:$0xff]
        %v1341 = vld [vmem:[#allocation11 + $0x110] sm:$0xff]
        %v1342 = vld [vmem:[#allocation11 + $0x118] sm:$0xff]
        %v1343 = vld [vmem:[#allocation11 + $0x120] sm:$0xff]
        %v1344 = vld [vmem:[#allocation11 + $0x128] sm:$0xff]
        %v1345 = vld [vmem:[#allocation11 + $0x130] sm:$0xff]
        %v1346 = vld [vmem:[#allocation11 + $0x138] sm:$0xff]
        %v1347 = vld [vmem:[#allocation11 + $0x140] sm:$0xff]
        %v1348 = vld [vmem:[#allocation11 + $0x148] sm:$0xff]
        %v1349 = vld [vmem:[#allocation11 + $0x150] sm:$0xff]
        %v1350 = vld [vmem:[#allocation11 + $0x158] sm:$0xff]
        %v1351 = vld [vmem:[#allocation11 + $0x160] sm:$0xff]
        %v1352 = vld [vmem:[#allocation11 + $0x168] sm:$0xff]
        %v1353 = vld [vmem:[#allocation11 + $0x170] sm:$0xff]
        %v1354 = vld [vmem:[#allocation11 + $0x178] sm:$0xff]
        %v1355 = vld [vmem:[#allocation11 + $0x180] sm:$0xff]
        %v1356 = vld [vmem:[#allocation11 + $0x188] sm:$0xff]
        %v1357 = vld [vmem:[#allocation11 + $0x190] sm:$0xff]
        %v1358 = vld [vmem:[#allocation11 + $0x198] sm:$0xff]
        %v1359 = vld [vmem:[#allocation11 + $0x1a0] sm:$0xff]
        %v1360 = vld [vmem:[#allocation11 + $0x1a8] sm:$0xff]
        %v1361 = vld [vmem:[#allocation11 + $0x1b0] sm:$0xff]
        %v1362 = vld [vmem:[#allocation11 + $0x1b8] sm:$0xff]
        %v1363 = vld [vmem:[#allocation11 + $0x1c0] sm:$0xff]
        %v1364 = vld [vmem:[#allocation11 + $0x1c8] sm:$0xff]
        %v1365 = vld [vmem:[#allocation11 + $0x1d0] sm:$0xff]
        %v1366 = vld [vmem:[#allocation11 + $0x1d8] sm:$0xff]
        %v1367 = vld [vmem:[#allocation11 + $0x1e0] sm:$0xff]
        %v1368 = vld [vmem:[#allocation11 + $0x1e8] sm:$0xff]
        %v1369 = vld [vmem:[#allocation11 + $0x1f0] sm:$0xff]
        %v1370 = vld [vmem:[#allocation11 + $0x1f8] sm:$0xff]
        %v1371 = vld [vmem:[#allocation11 + $0x200] sm:$0xff]
        %v1372 = vld [vmem:[#allocation11 + $0x208] sm:$0xff]
        %v1373 = vld [vmem:[#allocation11 + $0x210] sm:$0xff]
        %v1374 = vld [vmem:[#allocation11 + $0x218] sm:$0xff]
        %v1375 = vld [vmem:[#allocation11 + $0x220] sm:$0xff]
        %v1376 = vld [vmem:[#allocation11 + $0x228] sm:$0xff]
        %v1377 = vld [vmem:[#allocation11 + $0x230] sm:$0xff]
        %v1378 = vld [vmem:[#allocation11 + $0x238] sm:$0xff]
        %v1379 = vld [vmem:[#allocation11 + $0x240] sm:$0xff]
        %v1380 = vld [vmem:[#allocation11 + $0x248] sm:$0xff]
        %v1381 = vld [vmem:[#allocation11 + $0x250] sm:$0xff]
        %v1382 = vld [vmem:[#allocation11 + $0x258] sm:$0xff]
        %v1383 = vld [vmem:[#allocation11 + $0x260] sm:$0xff]
        %v1384 = vld [vmem:[#allocation11 + $0x268] sm:$0xff]
        %v1385 = vld [vmem:[#allocation11 + $0x270] sm:$0xff]
        %v1386 = vld [vmem:[#allocation11 + $0x278] sm:$0xff]
        %v1387 = vld [vmem:[#allocation11 + $0x280] sm:$0xff]
        %v1388 = vld [vmem:[#allocation11 + $0x288] sm:$0xff]
        %v1389 = vld [vmem:[#allocation11 + $0x290] sm:$0xff]
        %v1390 = vld [vmem:[#allocation11 + $0x298] sm:$0xff]
        %v1391 = vld [vmem:[#allocation11 + $0x2a0] sm:$0xff]
        %v1392 = vld [vmem:[#allocation11 + $0x2a8] sm:$0xff]
        %v1393 = vld [vmem:[#allocation11 + $0x2b0] sm:$0xff]
        %v1394 = vld [vmem:[#allocation11 + $0x2b8] sm:$0xff]
        %v1395 = vld [vmem:[#allocation11 + $0x2c0] sm:$0xff]
        %v1396 = vld [vmem:[#allocation11 + $0x2c8] sm:$0xff]
        %v1397 = vld [vmem:[#allocation11 + $0x2d0] sm:$0xff]
        %v1398 = vld [vmem:[#allocation11 + $0x2d8] sm:$0xff]
        %v1399 = vld [vmem:[#allocation11 + $0x2e0] sm:$0xff]
        %v1400 = vld [vmem:[#allocation11 + $0x2e8] sm:$0xff]
        %v1401 = vld [vmem:[#allocation11 + $0x2f0] sm:$0xff]
        %v1402 = vld [vmem:[#allocation11 + $0x2f8] sm:$0xff]
        %v1403 = vld [vmem:[#allocation11 + $0x300] sm:$0xff]
        %v1404 = vld [vmem:[#allocation11 + $0x308] sm:$0xff]
        %v1405 = vld [vmem:[#allocation11 + $0x310] sm:$0xff]
        %v1406 = vld [vmem:[#allocation11 + $0x318] sm:$0xff]
        %v1407 = vld [vmem:[#allocation11 + $0x320] sm:$0xff]
        %v1408 = vld [vmem:[#allocation11 + $0x328] sm:$0xff]
        %v1409 = vld [vmem:[#allocation11 + $0x330] sm:$0xff]
        %v1410 = vld [vmem:[#allocation11 + $0x338] sm:$0xff]
        %v1411 = vld [vmem:[#allocation11 + $0x340] sm:$0xff]
        %v1412 = vld [vmem:[#allocation11 + $0x348] sm:$0xff]
        %v1413 = vld [vmem:[#allocation11 + $0x350] sm:$0xff]
        %v1414 = vld [vmem:[#allocation11 + $0x358] sm:$0xff]
        %v1415 = vld [vmem:[#allocation11 + $0x360] sm:$0xff]
        %v1416 = vld [vmem:[#allocation11 + $0x368] sm:$0xff]
        %v1417 = vld [vmem:[#allocation11 + $0x370] sm:$0xff]
        %v1418 = vld [vmem:[#allocation11 + $0x378] sm:$0xff]
        %v1419 = vld [vmem:[#allocation11 + $0x380] sm:$0xff]
        %v1420 = vld [vmem:[#allocation11 + $0x388] sm:$0xff]
        %v1421 = vld [vmem:[#allocation11 + $0x390] sm:$0xff]
        %v1422 = vld [vmem:[#allocation11 + $0x398] sm:$0xff]
        %v1423 = vld [vmem:[#allocation11 + $0x3a0] sm:$0xff]
        %v1424 = vld [vmem:[#allocation11 + $0x3a8] sm:$0xff]
        %v1425 = vld [vmem:[#allocation11 + $0x3b0] sm:$0xff]
        %v1426 = vld [vmem:[#allocation11 + $0x3b8] sm:$0xff]
        %v1427 = vld [vmem:[#allocation11 + $0x3c0] sm:$0xff]
        %v1428 = vld [vmem:[#allocation11 + $0x3c8] sm:$0xff]
        %v1429 = vld [vmem:[#allocation11 + $0x3d0] sm:$0xff]
        %v1430 = vld [vmem:[#allocation11 + $0x3d8] sm:$0xff]
        %v1431 = vld [vmem:[#allocation11 + $0x3e0] sm:$0xff]
        %v1432 = vld [vmem:[#allocation11 + $0x3e8] sm:$0xff]
        %v1433 = vld [vmem:[#allocation11 + $0x3f0] sm:$0xff]
        %v1434 = vld [vmem:[#allocation11 + $0x3f8] sm:$0xff]
        %v1435 = vld [vmem:[#allocation11 + $0x400] sm:$0xff]
        %v1436 = vld [vmem:[#allocation11 + $0x408] sm:$0xff]
        %v1437 = vld [vmem:[#allocation11 + $0x410] sm:$0xff]
        %v1438 = vld [vmem:[#allocation11 + $0x418] sm:$0xff]
        %v1439 = vld [vmem:[#allocation11 + $0x420] sm:$0xff]
        %v1440 = vld [vmem:[#allocation11 + $0x428] sm:$0xff]
        %v1441 = vld [vmem:[#allocation11 + $0x430] sm:$0xff]
        %v1442 = vld [vmem:[#allocation11 + $0x438] sm:$0xff]
        %v1443 = vld [vmem:[#allocation11 + $0x440] sm:$0xff]
        %v1444 = vld [vmem:[#allocation11 + $0x448] sm:$0xff]
        %v1445 = vld [vmem:[#allocation11 + $0x450] sm:$0xff]
        %v1446 = vld [vmem:[#allocation11 + $0x458] sm:$0xff]
        %v1447 = vld [vmem:[#allocation11 + $0x460] sm:$0xff]
        %v1448 = vld [vmem:[#allocation11 + $0x468] sm:$0xff]
        %v1449 = vld [vmem:[#allocation11 + $0x470] sm:$0xff]
        %v1450 = vld [vmem:[#allocation11 + $0x478] sm:$0xff]
        %v1451 = vld [vmem:[#allocation11 + $0x480] sm:$0xff]
        %v1452 = vld [vmem:[#allocation11 + $0x488] sm:$0xff]
        %v1453 = vld [vmem:[#allocation11 + $0x490] sm:$0xff]
        %v1454 = vld [vmem:[#allocation11 + $0x498] sm:$0xff]
        %v1455 = vld [vmem:[#allocation11 + $0x4a0] sm:$0xff]
        %v1456 = vld [vmem:[#allocation11 + $0x4a8] sm:$0xff]
        %v1457 = vld [vmem:[#allocation11 + $0x4b0] sm:$0xff]
        %v1458 = vld [vmem:[#allocation11 + $0x4b8] sm:$0xff]
        %v1459 = vld [vmem:[#allocation11 + $0x4c0] sm:$0xff]
        %v1460 = vld [vmem:[#allocation11 + $0x4c8] sm:$0xff]
        %v1461 = vld [vmem:[#allocation11 + $0x4d0] sm:$0xff]
        %v1462 = vld [vmem:[#allocation11 + $0x4d8] sm:$0xff]
        %v1463 = vld [vmem:[#allocation11 + $0x4e0] sm:$0xff]
        %v1464 = vld [vmem:[#allocation11 + $0x4e8] sm:$0xff]
        %v1465 = vld [vmem:[#allocation11 + $0x4f0] sm:$0xff]
        %v1466 = vld [vmem:[#allocation11 + $0x4f8] sm:$0xff]
        %v1467 = vld [vmem:[#allocation11 + $0x500] sm:$0xff]
        %v1468 = vld [vmem:[#allocation11 + $0x508] sm:$0xff]
        %v1469 = vld [vmem:[#allocation11 + $0x510] sm:$0xff]
        %v1470 = vld [vmem:[#allocation11 + $0x518] sm:$0xff]
        %v1471 = vld [vmem:[#allocation11 + $0x520] sm:$0xff]
        %v1472 = vld [vmem:[#allocation11 + $0x528] sm:$0xff]
        %v1473 = vld [vmem:[#allocation11 + $0x530] sm:$0xff]
        %v1474 = vld [vmem:[#allocation11 + $0x538] sm:$0xff]
        %v1475 = vld [vmem:[#allocation11 + $0x540] sm:$0xff]
        %v1476 = vld [vmem:[#allocation11 + $0x548] sm:$0xff]
        %v1477 = vld [vmem:[#allocation11 + $0x550] sm:$0xff]
        %v1478 = vld [vmem:[#allocation11 + $0x558] sm:$0xff]
        %v1479 = vld [vmem:[#allocation11 + $0x560] sm:$0xff]
        %v1480 = vld [vmem:[#allocation11 + $0x568] sm:$0xff]
        %v1481 = vld [vmem:[#allocation11 + $0x570] sm:$0xff]
        %v1482 = vld [vmem:[#allocation11 + $0x578] sm:$0xff]
        %v1483 = vld [vmem:[#allocation11 + $0x580] sm:$0xff]
        %v1484 = vld [vmem:[#allocation11 + $0x588] sm:$0xff]
        %v1485 = vld [vmem:[#allocation11 + $0x590] sm:$0xff]
        %v1486 = vld [vmem:[#allocation11 + $0x598] sm:$0xff]
        %v1487 = vld [vmem:[#allocation11 + $0x5a0] sm:$0xff]
        %v1488 = vld [vmem:[#allocation11 + $0x5a8] sm:$0xff]
        %v1489 = vld [vmem:[#allocation11 + $0x5b0] sm:$0xff]
        %v1490 = vld [vmem:[#allocation11 + $0x5b8] sm:$0xff]
        %v1491 = vld [vmem:[#allocation11 + $0x5c0] sm:$0xff]
        %v1492 = vld [vmem:[#allocation11 + $0x5c8] sm:$0xff]
        %v1493 = vld [vmem:[#allocation11 + $0x5d0] sm:$0xff]
        %v1494 = vld [vmem:[#allocation11 + $0x5d8] sm:$0xff]
        %v1495 = vld [vmem:[#allocation11 + $0x5e0] sm:$0xff]
        %v1496 = vld [vmem:[#allocation11 + $0x5e8] sm:$0xff]
        %v1497 = vld [vmem:[#allocation11 + $0x5f0] sm:$0xff]
        %v1498 = vld [vmem:[#allocation11 + $0x5f8] sm:$0xff]
        %v1499 = vld [vmem:[#allocation11 + $0x600] sm:$0xff]
        %v1500 = vld [vmem:[#allocation11 + $0x608] sm:$0xff]
        %v1501 = vld [vmem:[#allocation11 + $0x610] sm:$0xff]
        %v1502 = vld [vmem:[#allocation11 + $0x618] sm:$0xff]
        %v1503 = vld [vmem:[#allocation11 + $0x620] sm:$0xff]
        %v1504 = vld [vmem:[#allocation11 + $0x628] sm:$0xff]
        %v1505 = vld [vmem:[#allocation11 + $0x630] sm:$0xff]
        %v1506 = vld [vmem:[#allocation11 + $0x638] sm:$0xff]
        %v1507 = vld [vmem:[#allocation11 + $0x640] sm:$0xff]
        %v1508 = vld [vmem:[#allocation11 + $0x648] sm:$0xff]
        %v1509 = vld [vmem:[#allocation11 + $0x650] sm:$0xff]
        %v1510 = vld [vmem:[#allocation11 + $0x658] sm:$0xff]
        %v1511 = vld [vmem:[#allocation11 + $0x660] sm:$0xff]
        %v1512 = vld [vmem:[#allocation11 + $0x668] sm:$0xff]
        %v1513 = vld [vmem:[#allocation11 + $0x670] sm:$0xff]
        %v1514 = vld [vmem:[#allocation11 + $0x678] sm:$0xff]
        %v1515 = vld [vmem:[#allocation11 + $0x680] sm:$0xff]
        %v1516 = vld [vmem:[#allocation11 + $0x688] sm:$0xff]
        %v1517 = vld [vmem:[#allocation11 + $0x690] sm:$0xff]
        %v1518 = vld [vmem:[#allocation11 + $0x698] sm:$0xff]
        %v1519 = vld [vmem:[#allocation11 + $0x6a0] sm:$0xff]
        %v1520 = vld [vmem:[#allocation11 + $0x6a8] sm:$0xff]
        %v1521 = vld [vmem:[#allocation11 + $0x6b0] sm:$0xff]
        %v1522 = vld [vmem:[#allocation11 + $0x6b8] sm:$0xff]
        %v1523 = vld [vmem:[#allocation11 + $0x6c0] sm:$0xff]
        %v1524 = vld [vmem:[#allocation11 + $0x6c8] sm:$0xff]
        %v1525 = vld [vmem:[#allocation11 + $0x6d0] sm:$0xff]
        %v1526 = vld [vmem:[#allocation11 + $0x6d8] sm:$0xff]
        %v1527 = vld [vmem:[#allocation11 + $0x6e0] sm:$0xff]
        %v1528 = vld [vmem:[#allocation11 + $0x6e8] sm:$0xff]
        %v1529 = vld [vmem:[#allocation11 + $0x6f0] sm:$0xff]
        %v1530 = vld [vmem:[#allocation11 + $0x6f8] sm:$0xff]
        %v1531 = vld [vmem:[#allocation11 + $0x700] sm:$0xff]
        %v1532 = vld [vmem:[#allocation11 + $0x708] sm:$0xff]
        %v1533 = vld [vmem:[#allocation11 + $0x710] sm:$0xff]
        %v1534 = vld [vmem:[#allocation11 + $0x718] sm:$0xff]
        %v1535 = vld [vmem:[#allocation11 + $0x720] sm:$0xff]
        %v1536 = vld [vmem:[#allocation11 + $0x728] sm:$0xff]
        %v1537 = vld [vmem:[#allocation11 + $0x730] sm:$0xff]
        %v1538 = vld [vmem:[#allocation11 + $0x738] sm:$0xff]
        %v1539 = vld [vmem:[#allocation11 + $0x740] sm:$0xff]
        %v1540 = vld [vmem:[#allocation11 + $0x748] sm:$0xff]
        %v1541 = vld [vmem:[#allocation11 + $0x750] sm:$0xff]
        %v1542 = vld [vmem:[#allocation11 + $0x758] sm:$0xff]
        %v1543 = vld [vmem:[#allocation11 + $0x760] sm:$0xff]
        %v1544 = vld [vmem:[#allocation11 + $0x768] sm:$0xff]
        %v1545 = vld [vmem:[#allocation11 + $0x770] sm:$0xff]
        %v1546 = vld [vmem:[#allocation11 + $0x778] sm:$0xff]
        %v1547 = vld [vmem:[#allocation11 + $0x780] sm:$0xff]
        %v1548 = vld [vmem:[#allocation11 + $0x788] sm:$0xff]
        %v1549 = vld [vmem:[#allocation11 + $0x790] sm:$0xff]
        %v1550 = vld [vmem:[#allocation11 + $0x798] sm:$0xff]
        %v1551 = vld [vmem:[#allocation11 + $0x7a0] sm:$0xff]
        %v1552 = vld [vmem:[#allocation11 + $0x7a8] sm:$0xff]
        %v1553 = vld [vmem:[#allocation11 + $0x7b0] sm:$0xff]
        %v1554 = vld [vmem:[#allocation11 + $0x7b8] sm:$0xff]
        %v1555 = vld [vmem:[#allocation11 + $0x7c0] sm:$0xff]
        %v1556 = vld [vmem:[#allocation11 + $0x7c8] sm:$0xff]
        %v1557 = vld [vmem:[#allocation11 + $0x7d0] sm:$0xff]
        %v1558 = vld [vmem:[#allocation11 + $0x7d8] sm:$0xff]
        %v1559 = vld [vmem:[#allocation11 + $0x7e0] sm:$0xff]
        %v1560 = vld [vmem:[#allocation11 + $0x7e8] sm:$0xff]
        %v1561 = vld [vmem:[#allocation11 + $0x7f0] sm:$0xff]
        %v1562 = vld [vmem:[#allocation11 + $0x7f8] sm:$0xff]
        %v1563 = vld [vmem:[%s6] sm:$0xf]
        %v1565 = vperm.slane %v1563, 0
        %v1566 = vperm.slane %v1563, 1
        %v1567 = vperm.slane %v1563, 2
        %v1568 = vperm.slane %v1563, 3
        %1573 = vmatpush.msra.mxu0 %v1367
        %1574 = vmatpush.msra.mxu0 %v1363
        %1575 = vmatpush.msra.mxu0 %v1359
        %1576 = vmatpush.msra.mxu0 %v1355
        %1577 = vmatpush.msra.mxu0 %v1351
        %1578 = vmatpush.msra.mxu0 %v1347
        %1579 = vmatpush.msra.mxu0 %v1343
        %1580 = vmatpush.msra.mxu0 %v1339
        %1581 = vmatpush.msra.mxu0 %v1335
        %1582 = vmatpush.msra.mxu0 %v1331
        %1583 = vmatpush.msra.mxu0 %v1327
        %1584 = vmatpush.msra.mxu0 %v1323
        %1585 = vmatpush.msra.mxu0 %v1319
        %1586 = vmatpush.msra.mxu0 %v1315
        %1587 = vmatpush.msra.mxu0 %v1311
        %1588 = vmatpush.msra.mxu0 %v1307
        %1589 = vmatmul.f32.gmra.mxu0 %v1303
        %v1590 = vpop.f32.mrf.mxu0
        %v1591 = vadd.f32 %v1565, %v1590
        %1592 = vdwg.mxu0
        %1593 = vmatpush.msra.mxu0 %v1431
        %1594 = vmatpush.msra.mxu0 %v1427
        %1595 = vmatpush.msra.mxu0 %v1423
        %1596 = vmatpush.msra.mxu0 %v1419
        %1597 = vmatpush.msra.mxu0 %v1415
        %1598 = vmatpush.msra.mxu0 %v1411
        %1599 = vmatpush.msra.mxu0 %v1407
        %1600 = vmatpush.msra.mxu0 %v1403
        %1601 = vmatpush.msra.mxu0 %v1399
        %1602 = vmatpush.msra.mxu0 %v1395
        %1603 = vmatpush.msra.mxu0 %v1391
        %1604 = vmatpush.msra.mxu0 %v1387
        %1605 = vmatpush.msra.mxu0 %v1383
        %1606 = vmatpush.msra.mxu0 %v1379
        %1607 = vmatpush.msra.mxu0 %v1375
        %1608 = vmatpush.msra.mxu0 %v1371
        %1609 = vmatmul.f32.gmra.mxu0 %v1304
        %v1610 = vpop.f32.mrf.mxu0
        %v1611 = vadd.f32 %v1591, %v1610
        %1612 = vdwg.mxu0
        %1613 = vmatpush.msra.mxu0 %v1495
        %1614 = vmatpush.msra.mxu0 %v1491
        %1615 = vmatpush.msra.mxu0 %v1487
        %1616 = vmatpush.msra.mxu0 %v1483
        %1617 = vmatpush.msra.mxu0 %v1479
        %1618 = vmatpush.msra.mxu0 %v1475
        %1619 = vmatpush.msra.mxu0 %v1471
        %1620 = vmatpush.msra.mxu0 %v1467
        %1621 = vmatpush.msra.mxu0 %v1463
        %1622 = vmatpush.msra.mxu0 %v1459
        %1623 = vmatpush.msra.mxu0 %v1455
        %1624 = vmatpush.msra.mxu0 %v1451
        %1625 = vmatpush.msra.mxu0 %v1447
        %1626 = vmatpush.msra.mxu0 %v1443
        %1627 = vmatpush.msra.mxu0 %v1439
        %1628 = vmatpush.msra.mxu0 %v1435
        %1629 = vmatmul.f32.gmra.mxu0 %v1305
        %v1630 = vpop.f32.mrf.mxu0
        %v1631 = vadd.f32 %v1611, %v1630
        %1632 = vdwg.mxu0
        %1633 = vmatpush.msra.mxu0 %v1559
        %1634 = vmatpush.msra.mxu0 %v1555
        %1635 = vmatpush.msra.mxu0 %v1551
        %1636 = vmatpush.msra.mxu0 %v1547
        %1637 = vmatpush.msra.mxu0 %v1543
        %1638 = vmatpush.msra.mxu0 %v1539
        %1639 = vmatpush.msra.mxu0 %v1535
        %1640 = vmatpush.msra.mxu0 %v1531
        %1641 = vmatpush.msra.mxu0 %v1527
        %1642 = vmatpush.msra.mxu0 %v1523
        %1643 = vmatpush.msra.mxu0 %v1519
        %1644 = vmatpush.msra.mxu0 %v1515
        %1645 = vmatpush.msra.mxu0 %v1511
        %1646 = vmatpush.msra.mxu0 %v1507
        %1647 = vmatpush.msra.mxu0 %v1503
        %1648 = vmatpush.msra.mxu0 %v1499
        %1649 = vmatmul.f32.gmra.mxu0 %v1306
        %v1650 = vpop.f32.mrf.mxu0
        %v1651 = vadd.f32 %v1631, %v1650
        %1652 = vdwg.mxu0
        %1653 = vmatpush.msra.mxu0 %v1368
        %1654 = vmatpush.msra.mxu0 %v1364
        %1655 = vmatpush.msra.mxu0 %v1360
        %1656 = vmatpush.msra.mxu0 %v1356
        %1657 = vmatpush.msra.mxu0 %v1352
        %1658 = vmatpush.msra.mxu0 %v1348
        %1659 = vmatpush.msra.mxu0 %v1344
        %1660 = vmatpush.msra.mxu0 %v1340
        %1661 = vmatpush.msra.mxu0 %v1336
        %1662 = vmatpush.msra.mxu0 %v1332
        %1663 = vmatpush.msra.mxu0 %v1328
        %1664 = vmatpush.msra.mxu0 %v1324
        %1665 = vmatpush.msra.mxu0 %v1320
        %1666 = vmatpush.msra.mxu0 %v1316
        %1667 = vmatpush.msra.mxu0 %v1312
        %1668 = vmatpush.msra.mxu0 %v1308
        %1669 = vmatmul.f32.gmra.mxu0 %v1303
        %v1670 = vpop.f32.mrf.mxu0
        %v1671 = vadd.f32 %v1566, %v1670
        %1672 = vdwg.mxu0
        %1673 = vmatpush.msra.mxu0 %v1432
        %1674 = vmatpush.msra.mxu0 %v1428
        %1675 = vmatpush.msra.mxu0 %v1424
        %1676 = vmatpush.msra.mxu0 %v1420
        %1677 = vmatpush.msra.mxu0 %v1416
        %1678 = vmatpush.msra.mxu0 %v1412
        %1679 = vmatpush.msra.mxu0 %v1408
        %1680 = vmatpush.msra.mxu0 %v1404
        %1681 = vmatpush.msra.mxu0 %v1400
        %1682 = vmatpush.msra.mxu0 %v1396
        %1683 = vmatpush.msra.mxu0 %v1392
        %1684 = vmatpush.msra.mxu0 %v1388
        %1685 = vmatpush.msra.mxu0 %v1384
        %1686 = vmatpush.msra.mxu0 %v1380
        %1687 = vmatpush.msra.mxu0 %v1376
        %1688 = vmatpush.msra.mxu0 %v1372
        %1689 = vmatmul.f32.gmra.mxu0 %v1304
        %v1690 = vpop.f32.mrf.mxu0
        %v1691 = vadd.f32 %v1671, %v1690
        %1692 = vdwg.mxu0
        %1693 = vmatpush.msra.mxu0 %v1496
        %1694 = vmatpush.msra.mxu0 %v1492
        %1695 = vmatpush.msra.mxu0 %v1488
        %1696 = vmatpush.msra.mxu0 %v1484
        %1697 = vmatpush.msra.mxu0 %v1480
        %1698 = vmatpush.msra.mxu0 %v1476
        %1699 = vmatpush.msra.mxu0 %v1472
        %1700 = vmatpush.msra.mxu0 %v1468
        %1701 = vmatpush.msra.mxu0 %v1464
        %1702 = vmatpush.msra.mxu0 %v1460
        %1703 = vmatpush.msra.mxu0 %v1456
        %1704 = vmatpush.msra.mxu0 %v1452
        %1705 = vmatpush.msra.mxu0 %v1448
        %1706 = vmatpush.msra.mxu0 %v1444
        %1707 = vmatpush.msra.mxu0 %v1440
        %1708 = vmatpush.msra.mxu0 %v1436
        %1709 = vmatmul.f32.gmra.mxu0 %v1305
        %v1710 = vpop.f32.mrf.mxu0
        %v1711 = vadd.f32 %v1691, %v1710
        %1712 = vdwg.mxu0
        %1713 = vmatpush.msra.mxu0 %v1560
        %1714 = vmatpush.msra.mxu0 %v1556
        %1715 = vmatpush.msra.mxu0 %v1552
        %1716 = vmatpush.msra.mxu0 %v1548
        %1717 = vmatpush.msra.mxu0 %v1544
        %1718 = vmatpush.msra.mxu0 %v1540
        %1719 = vmatpush.msra.mxu0 %v1536
        %1720 = vmatpush.msra.mxu0 %v1532
        %1721 = vmatpush.msra.mxu0 %v1528
        %1722 = vmatpush.msra.mxu0 %v1524
        %1723 = vmatpush.msra.mxu0 %v1520
        %1724 = vmatpush.msra.mxu0 %v1516
        %1725 = vmatpush.msra.mxu0 %v1512
        %1726 = vmatpush.msra.mxu0 %v1508
        %1727 = vmatpush.msra.mxu0 %v1504
        %1728 = vmatpush.msra.mxu0 %v1500
        %1729 = vmatmul.f32.gmra.mxu0 %v1306
        %v1730 = vpop.f32.mrf.mxu0
        %v1731 = vadd.f32 %v1711, %v1730
        %1732 = vdwg.mxu0
        %1733 = vmatpush.msra.mxu0 %v1369
        %1734 = vmatpush.msra.mxu0 %v1365
        %1735 = vmatpush.msra.mxu0 %v1361
        %1736 = vmatpush.msra.mxu0 %v1357
        %1737 = vmatpush.msra.mxu0 %v1353
        %1738 = vmatpush.msra.mxu0 %v1349
        %1739 = vmatpush.msra.mxu0 %v1345
        %1740 = vmatpush.msra.mxu0 %v1341
        %1741 = vmatpush.msra.mxu0 %v1337
        %1742 = vmatpush.msra.mxu0 %v1333
        %1743 = vmatpush.msra.mxu0 %v1329
        %1744 = vmatpush.msra.mxu0 %v1325
        %1745 = vmatpush.msra.mxu0 %v1321
        %1746 = vmatpush.msra.mxu0 %v1317
        %1747 = vmatpush.msra.mxu0 %v1313
        %1748 = vmatpush.msra.mxu0 %v1309
        %1749 = vmatmul.f32.gmra.mxu0 %v1303
        %v1750 = vpop.f32.mrf.mxu0
        %v1751 = vadd.f32 %v1567, %v1750
        %1752 = vdwg.mxu0
        %1753 = vmatpush.msra.mxu0 %v1433
        %1754 = vmatpush.msra.mxu0 %v1429
        %1755 = vmatpush.msra.mxu0 %v1425
        %1756 = vmatpush.msra.mxu0 %v1421
        %1757 = vmatpush.msra.mxu0 %v1417
        %1758 = vmatpush.msra.mxu0 %v1413
        %1759 = vmatpush.msra.mxu0 %v1409
        %1760 = vmatpush.msra.mxu0 %v1405
        %1761 = vmatpush.msra.mxu0 %v1401
        %1762 = vmatpush.msra.mxu0 %v1397
        %1763 = vmatpush.msra.mxu0 %v1393
        %1764 = vmatpush.msra.mxu0 %v1389
        %1765 = vmatpush.msra.mxu0 %v1385
        %1766 = vmatpush.msra.mxu0 %v1381
        %1767 = vmatpush.msra.mxu0 %v1377
        %1768 = vmatpush.msra.mxu0 %v1373
        %1769 = vmatmul.f32.gmra.mxu0 %v1304
        %v1770 = vpop.f32.mrf.mxu0
        %v1771 = vadd.f32 %v1751, %v1770
        %1772 = vdwg.mxu0
        %1773 = vmatpush.msra.mxu0 %v1497
        %1774 = vmatpush.msra.mxu0 %v1493
        %1775 = vmatpush.msra.mxu0 %v1489
        %1776 = vmatpush.msra.mxu0 %v1485
        %1777 = vmatpush.msra.mxu0 %v1481
        %1778 = vmatpush.msra.mxu0 %v1477
        %1779 = vmatpush.msra.mxu0 %v1473
        %1780 = vmatpush.msra.mxu0 %v1469
        %1781 = vmatpush.msra.mxu0 %v1465
        %1782 = vmatpush.msra.mxu0 %v1461
        %1783 = vmatpush.msra.mxu0 %v1457
        %1784 = vmatpush.msra.mxu0 %v1453
        %1785 = vmatpush.msra.mxu0 %v1449
        %1786 = vmatpush.msra.mxu0 %v1445
        %1787 = vmatpush.msra.mxu0 %v1441
        %1788 = vmatpush.msra.mxu0 %v1437
        %1789 = vmatmul.f32.gmra.mxu0 %v1305
        %v1790 = vpop.f32.mrf.mxu0
        %v1791 = vadd.f32 %v1771, %v1790
        %1792 = vdwg.mxu0
        %1793 = vmatpush.msra.mxu0 %v1561
        %1794 = vmatpush.msra.mxu0 %v1557
        %1795 = vmatpush.msra.mxu0 %v1553
        %1796 = vmatpush.msra.mxu0 %v1549
        %1797 = vmatpush.msra.mxu0 %v1545
        %1798 = vmatpush.msra.mxu0 %v1541
        %1799 = vmatpush.msra.mxu0 %v1537
        %1800 = vmatpush.msra.mxu0 %v1533
        %1801 = vmatpush.msra.mxu0 %v1529
        %1802 = vmatpush.msra.mxu0 %v1525
        %1803 = vmatpush.msra.mxu0 %v1521
        %1804 = vmatpush.msra.mxu0 %v1517
        %1805 = vmatpush.msra.mxu0 %v1513
        %1806 = vmatpush.msra.mxu0 %v1509
        %1807 = vmatpush.msra.mxu0 %v1505
        %1808 = vmatpush.msra.mxu0 %v1501
        %1809 = vmatmul.f32.gmra.mxu0 %v1306
        %v1810 = vpop.f32.mrf.mxu0
        %v1811 = vadd.f32 %v1791, %v1810
        %1812 = vdwg.mxu0
        %1813 = vmatpush.msra.mxu0 %v1370
        %1814 = vmatpush.msra.mxu0 %v1366
        %1815 = vmatpush.msra.mxu0 %v1362
        %1816 = vmatpush.msra.mxu0 %v1358
        %1817 = vmatpush.msra.mxu0 %v1354
        %1818 = vmatpush.msra.mxu0 %v1350
        %1819 = vmatpush.msra.mxu0 %v1346
        %1820 = vmatpush.msra.mxu0 %v1342
        %1821 = vmatpush.msra.mxu0 %v1338
        %1822 = vmatpush.msra.mxu0 %v1334
        %1823 = vmatpush.msra.mxu0 %v1330
        %1824 = vmatpush.msra.mxu0 %v1326
        %1825 = vmatpush.msra.mxu0 %v1322
        %1826 = vmatpush.msra.mxu0 %v1318
        %1827 = vmatpush.msra.mxu0 %v1314
        %1828 = vmatpush.msra.mxu0 %v1310
        %1829 = vmatmul.f32.gmra.mxu0 %v1303
        %v1830 = vpop.f32.mrf.mxu0
        %v1831 = vadd.f32 %v1568, %v1830
        %1832 = vdwg.mxu0
        %1833 = vmatpush.msra.mxu0 %v1434
        %1834 = vmatpush.msra.mxu0 %v1430
        %1835 = vmatpush.msra.mxu0 %v1426
        %1836 = vmatpush.msra.mxu0 %v1422
        %1837 = vmatpush.msra.mxu0 %v1418
        %1838 = vmatpush.msra.mxu0 %v1414
        %1839 = vmatpush.msra.mxu0 %v1410
        %1840 = vmatpush.msra.mxu0 %v1406
        %1841 = vmatpush.msra.mxu0 %v1402
        %1842 = vmatpush.msra.mxu0 %v1398
        %1843 = vmatpush.msra.mxu0 %v1394
        %1844 = vmatpush.msra.mxu0 %v1390
        %1845 = vmatpush.msra.mxu0 %v1386
        %1846 = vmatpush.msra.mxu0 %v1382
        %1847 = vmatpush.msra.mxu0 %v1378
        %1848 = vmatpush.msra.mxu0 %v1374
        %1849 = vmatmul.f32.gmra.mxu0 %v1304
        %v1850 = vpop.f32.mrf.mxu0
        %v1851 = vadd.f32 %v1831, %v1850
        %1852 = vdwg.mxu0
        %1853 = vmatpush.msra.mxu0 %v1498
        %1854 = vmatpush.msra.mxu0 %v1494
        %1855 = vmatpush.msra.mxu0 %v1490
        %1856 = vmatpush.msra.mxu0 %v1486
        %1857 = vmatpush.msra.mxu0 %v1482
        %1858 = vmatpush.msra.mxu0 %v1478
        %1859 = vmatpush.msra.mxu0 %v1474
        %1860 = vmatpush.msra.mxu0 %v1470
        %1861 = vmatpush.msra.mxu0 %v1466
        %1862 = vmatpush.msra.mxu0 %v1462
        %1863 = vmatpush.msra.mxu0 %v1458
        %1864 = vmatpush.msra.mxu0 %v1454
        %1865 = vmatpush.msra.mxu0 %v1450
        %1866 = vmatpush.msra.mxu0 %v1446
        %1867 = vmatpush.msra.mxu0 %v1442
        %1868 = vmatpush.msra.mxu0 %v1438
        %1869 = vmatmul.f32.gmra.mxu0 %v1305
        %v1870 = vpop.f32.mrf.mxu0
        %v1871 = vadd.f32 %v1851, %v1870
        %1872 = vdwg.mxu0
        %1873 = vmatpush.msra.mxu0 %v1562
        %1874 = vmatpush.msra.mxu0 %v1558
        %1875 = vmatpush.msra.mxu0 %v1554
        %1876 = vmatpush.msra.mxu0 %v1550
        %1877 = vmatpush.msra.mxu0 %v1546
        %1878 = vmatpush.msra.mxu0 %v1542
        %1879 = vmatpush.msra.mxu0 %v1538
        %1880 = vmatpush.msra.mxu0 %v1534
        %1881 = vmatpush.msra.mxu0 %v1530
        %1882 = vmatpush.msra.mxu0 %v1526
        %1883 = vmatpush.msra.mxu0 %v1522
        %1884 = vmatpush.msra.mxu0 %v1518
        %1885 = vmatpush.msra.mxu0 %v1514
        %1886 = vmatpush.msra.mxu0 %v1510
        %1887 = vmatpush.msra.mxu0 %v1506
        %1888 = vmatpush.msra.mxu0 %v1502
        %1889 = vmatmul.f32.gmra.mxu0 %v1306
        %v1890 = vpop.f32.mrf.mxu0
        %v1891 = vadd.f32 %v1871, %v1890
        %1892 = vdwg.mxu0
        %v1893 = vmax.f32 %v1651, 0.0
        %v1894 = vmax.f32 %v1731, 0.0
        %v1895 = vmax.f32 %v1811, 0.0
        %v1896 = vmax.f32 %v1891, 0.0
        %v1897 = vld [vmem:[#allocation12] sm:$0xff]
        %v1898 = vld [vmem:[#allocation12 + $0x8] sm:$0xff]
        %v1899 = vld [vmem:[#allocation12 + $0x10] sm:$0xff]
        %v1900 = vld [vmem:[#allocation12 + $0x18] sm:$0xff]
        %v1901 = vld [vmem:[#allocation12 + $0x20] sm:$0xff]
        %v1902 = vld [vmem:[#allocation12 + $0x28] sm:$0xff]
        %v1903 = vld [vmem:[#allocation12 + $0x30] sm:$0xff]
        %v1904 = vld [vmem:[#allocation12 + $0x38] sm:$0xff]
        %v1905 = vld [vmem:[#allocation12 + $0x40] sm:$0xff]
        %v1906 = vld [vmem:[#allocation12 + $0x48] sm:$0xff]
        %v1907 = vld [vmem:[#allocation12 + $0x50] sm:$0xff]
        %v1908 = vld [vmem:[#allocation12 + $0x58] sm:$0xff]
        %v1909 = vld [vmem:[#allocation12 + $0x60] sm:$0xff]
        %v1910 = vld [vmem:[#allocation12 + $0x68] sm:$0xff]
        %v1911 = vld [vmem:[#allocation12 + $0x70] sm:$0xff]
        %v1912 = vld [vmem:[#allocation12 + $0x78] sm:$0xff]
        %v1913 = vld [vmem:[#allocation12 + $0x80] sm:$0xff]
        %v1914 = vld [vmem:[#allocation12 + $0x88] sm:$0xff]
        %v1915 = vld [vmem:[#allocation12 + $0x90] sm:$0xff]
        %v1916 = vld [vmem:[#allocation12 + $0x98] sm:$0xff]
        %v1917 = vld [vmem:[#allocation12 + $0xa0] sm:$0xff]
        %v1918 = vld [vmem:[#allocation12 + $0xa8] sm:$0xff]
        %v1919 = vld [vmem:[#allocation12 + $0xb0] sm:$0xff]
        %v1920 = vld [vmem:[#allocation12 + $0xb8] sm:$0xff]
        %v1921 = vld [vmem:[#allocation12 + $0xc0] sm:$0xff]
        %v1922 = vld [vmem:[#allocation12 + $0xc8] sm:$0xff]
        %v1923 = vld [vmem:[#allocation12 + $0xd0] sm:$0xff]
        %v1924 = vld [vmem:[#allocation12 + $0xd8] sm:$0xff]
        %v1925 = vld [vmem:[#allocation12 + $0xe0] sm:$0xff]
        %v1926 = vld [vmem:[#allocation12 + $0xe8] sm:$0xff]
        %v1927 = vld [vmem:[#allocation12 + $0xf0] sm:$0xff]
        %v1928 = vld [vmem:[#allocation12 + $0xf8] sm:$0xff]
        %v1929 = vld [vmem:[#allocation12 + $0x100] sm:$0xff]
        %v1930 = vld [vmem:[#allocation12 + $0x108] sm:$0xff]
        %v1931 = vld [vmem:[#allocation12 + $0x110] sm:$0xff]
        %v1932 = vld [vmem:[#allocation12 + $0x118] sm:$0xff]
        %v1933 = vld [vmem:[#allocation12 + $0x120] sm:$0xff]
        %v1934 = vld [vmem:[#allocation12 + $0x128] sm:$0xff]
        %v1935 = vld [vmem:[#allocation12 + $0x130] sm:$0xff]
        %v1936 = vld [vmem:[#allocation12 + $0x138] sm:$0xff]
        %v1937 = vld [vmem:[#allocation12 + $0x140] sm:$0xff]
        %v1938 = vld [vmem:[#allocation12 + $0x148] sm:$0xff]
        %v1939 = vld [vmem:[#allocation12 + $0x150] sm:$0xff]
        %v1940 = vld [vmem:[#allocation12 + $0x158] sm:$0xff]
        %v1941 = vld [vmem:[#allocation12 + $0x160] sm:$0xff]
        %v1942 = vld [vmem:[#allocation12 + $0x168] sm:$0xff]
        %v1943 = vld [vmem:[#allocation12 + $0x170] sm:$0xff]
        %v1944 = vld [vmem:[#allocation12 + $0x178] sm:$0xff]
        %v1945 = vld [vmem:[#allocation12 + $0x180] sm:$0xff]
        %v1946 = vld [vmem:[#allocation12 + $0x188] sm:$0xff]
        %v1947 = vld [vmem:[#allocation12 + $0x190] sm:$0xff]
        %v1948 = vld [vmem:[#allocation12 + $0x198] sm:$0xff]
        %v1949 = vld [vmem:[#allocation12 + $0x1a0] sm:$0xff]
        %v1950 = vld [vmem:[#allocation12 + $0x1a8] sm:$0xff]
        %v1951 = vld [vmem:[#allocation12 + $0x1b0] sm:$0xff]
        %v1952 = vld [vmem:[#allocation12 + $0x1b8] sm:$0xff]
        %v1953 = vld [vmem:[#allocation12 + $0x1c0] sm:$0xff]
        %v1954 = vld [vmem:[#allocation12 + $0x1c8] sm:$0xff]
        %v1955 = vld [vmem:[#allocation12 + $0x1d0] sm:$0xff]
        %v1956 = vld [vmem:[#allocation12 + $0x1d8] sm:$0xff]
        %v1957 = vld [vmem:[#allocation12 + $0x1e0] sm:$0xff]
        %v1958 = vld [vmem:[#allocation12 + $0x1e8] sm:$0xff]
        %v1959 = vld [vmem:[#allocation12 + $0x1f0] sm:$0xff]
        %v1960 = vld [vmem:[#allocation12 + $0x1f8] sm:$0xff]
        %v1961 = vld [vmem:[#allocation14] sm:$0x1]
        %v1963 = vperm.slane %v1961, 0
        %1965 = vmatpush.msra.mxu0 %v1912
        %1966 = vmatpush.msra.mxu0 %v1911
        %1967 = vmatpush.msra.mxu0 %v1910
        %1968 = vmatpush.msra.mxu0 %v1909
        %1969 = vmatpush.msra.mxu0 %v1908
        %1970 = vmatpush.msra.mxu0 %v1907
        %1971 = vmatpush.msra.mxu0 %v1906
        %1972 = vmatpush.msra.mxu0 %v1905
        %1973 = vmatpush.msra.mxu0 %v1904
        %1974 = vmatpush.msra.mxu0 %v1903
        %1975 = vmatpush.msra.mxu0 %v1902
        %1976 = vmatpush.msra.mxu0 %v1901
        %1977 = vmatpush.msra.mxu0 %v1900
        %1978 = vmatpush.msra.mxu0 %v1899
        %1979 = vmatpush.msra.mxu0 %v1898
        %1980 = vmatpush.msra.mxu0 %v1897
        %1981 = vmatmul.f32.gmra.mxu0 %v1893
        %v1982 = vpop.f32.mrf.mxu0
        %v1983 = vadd.f32 %v1963, %v1982
        %1984 = vdwg.mxu0
        %1985 = vmatpush.msra.mxu0 %v1928
        %1986 = vmatpush.msra.mxu0 %v1927
        %1987 = vmatpush.msra.mxu0 %v1926
        %1988 = vmatpush.msra.mxu0 %v1925
        %1989 = vmatpush.msra.mxu0 %v1924
        %1990 = vmatpush.msra.mxu0 %v1923
        %1991 = vmatpush.msra.mxu0 %v1922
        %1992 = vmatpush.msra.mxu0 %v1921
        %1993 = vmatpush.msra.mxu0 %v1920
        %1994 = vmatpush.msra.mxu0 %v1919
        %1995 = vmatpush.msra.mxu0 %v1918
        %1996 = vmatpush.msra.mxu0 %v1917
        %1997 = vmatpush.msra.mxu0 %v1916
        %1998 = vmatpush.msra.mxu0 %v1915
        %1999 = vmatpush.msra.mxu0 %v1914
        %2000 = vmatpush.msra.mxu0 %v1913
        %2001 = vmatmul.f32.gmra.mxu0 %v1894
        %v2002 = vpop.f32.mrf.mxu0
        %v2003 = vadd.f32 %v1983, %v2002
        %2004 = vdwg.mxu0
        %2005 = vmatpush.msra.mxu0 %v1944
        %2006 = vmatpush.msra.mxu0 %v1943
        %2007 = vmatpush.msra.mxu0 %v1942
        %2008 = vmatpush.msra.mxu0 %v1941
        %2009 = vmatpush.msra.mxu0 %v1940
        %2010 = vmatpush.msra.mxu0 %v1939
        %2011 = vmatpush.msra.mxu0 %v1938
        %2012 = vmatpush.msra.mxu0 %v1937
        %2013 = vmatpush.msra.mxu0 %v1936
        %2014 = vmatpush.msra.mxu0 %v1935
        %2015 = vmatpush.msra.mxu0 %v1934
        %2016 = vmatpush.msra.mxu0 %v1933
        %2017 = vmatpush.msra.mxu0 %v1932
        %2018 = vmatpush.msra.mxu0 %v1931
        %2019 = vmatpush.msra.mxu0 %v1930
        %2020 = vmatpush.msra.mxu0 %v1929
        %2021 = vmatmul.f32.gmra.mxu0 %v1895
        %v2022 = vpop.f32.mrf.mxu0
        %v2023 = vadd.f32 %v2003, %v2022
        %2024 = vdwg.mxu0
        %2025 = vmatpush.msra.mxu0 %v1960
        %2026 = vmatpush.msra.mxu0 %v1959
        %2027 = vmatpush.msra.mxu0 %v1958
        %2028 = vmatpush.msra.mxu0 %v1957
        %2029 = vmatpush.msra.mxu0 %v1956
        %2030 = vmatpush.msra.mxu0 %v1955
        %2031 = vmatpush.msra.mxu0 %v1954
        %2032 = vmatpush.msra.mxu0 %v1953
        %2033 = vmatpush.msra.mxu0 %v1952
        %2034 = vmatpush.msra.mxu0 %v1951
        %2035 = vmatpush.msra.mxu0 %v1950
        %2036 = vmatpush.msra.mxu0 %v1949
        %2037 = vmatpush.msra.mxu0 %v1948
        %2038 = vmatpush.msra.mxu0 %v1947
        %2039 = vmatpush.msra.mxu0 %v1946
        %2040 = vmatpush.msra.mxu0 %v1945
        %2041 = vmatmul.f32.gmra.mxu0 %v1896
        %v2042 = vpop.f32.mrf.mxu0
        %v2043 = vadd.f32 %v2023, %v2042
        %2044 = vdwg.mxu0
        %v2045 = vtanh.pop %v2043
        %v2046 = vld [vmem:[%s9] sm:$0x1]
        %v2048 = vperm.slane %v2046, 0
        %v2050 = vmul.f32 %v2045, %v2048
        %2051 = vadd.xlane.f32.xlu0 %v2050
        %v2052 = vpop.xlane.xlu0 %2051
        %v2053 = vld [vmem:[#allocation2] sm:$0x1]
        %v2055 = vperm.slane %v2053, 0
        %v2057 = vadd.f32 %v2052, %v2055
        %vm2058 = vcmask 7168
        %v2059 = vsel %vm2058, %v2057, -inf
        %v2060 = vrot.slane %v2059, 4
        %v2061 = vmax.f32 %v2059, %v2060
        %v2062 = vrot.slane %v2061, 2
        %v2063 = vmax.f32 %v2061, %v2062
        %v2064 = vrot.slane %v2063, 1
        %v2065 = vmax.f32 %v2063, %v2064
        %v2066 = vsub.f32 %v2057, %v2065
        %v2067 = vmul.f32 %v2066, 1.442695
        %v2068 = vpow.pop %v2067
        %v2069 = vsel %vm2058, %v2068, 0.0
        %v2070 = vrot.slane %v2069, 4
        %v2071 = vadd.f32 %v2069, %v2070
        %v2072 = vrot.slane %v2071, 2
        %v2073 = vadd.f32 %v2071, %v2072
        %v2074 = vrot.slane %v2073, 1
        %v2075 = vadd.f32 %v2073, %v2074
        %v2076 = vrcp.pop %v2075
        %v2077 = vmul.f32 %v2075, %v2076
        %v2078 = vsub.f32 1.0, %v2077
        %v2079 = vmul.f32 %v2076, %v2078
        %v2080 = vadd.f32 %v2076, %v2079
        %vm2081 = vweird.f32 %v2075
        %vm2082 = vweird.f32 %v2076
        %vm2083 = vmor %vm2081, %vm2082
        %v2084 = vsel %vm2083, %v2076, %v2080
        %v2085 = vand.u32 2147483647, %v2075
        %vm2086 = vcmp.eq.f32.partialorder %v2085, 8.507059e+37
        %v2087 = vand.u32 %v2075, 2147483648
        %v2088 = vor.u32 1.1754944e-38, %v2087
        %v2089 = vsel %vm2086, %v2088, %v2084
        %v2090 = vmul.f32 %v2068, %v2089
        %2092 = vset.pattern.permute.xlu0 0
        %2093 = vperm.xlu0 %2092, %v2090
        %v2094 = vpop.permute.xlu0 %2093
        %v2096 = vmul.f32 %v2094, %v1893
        %v2097 = vmul.f32 %v2094, %v1894
        %v2098 = vmul.f32 %v2094, %v1895
        %v2099 = vmul.f32 %v2094, %v1896
        %v2100 = vrot.slane %v2096, 4
        %v2101 = vadd.f32 %v2096, %v2100
        %v2102 = vrot.slane %v2101, 2
        %v2103 = vadd.f32 %v2101, %v2102
        %v2104 = vrot.slane %v2103, 1
        %v2105 = vadd.f32 %v2103, %v2104
        %v2106 = vrot.slane %v2097, 4
        %v2107 = vadd.f32 %v2097, %v2106
        %v2108 = vrot.slane %v2107, 2
        %v2109 = vadd.f32 %v2107, %v2108
        %v2110 = vrot.slane %v2109, 1
        %v2111 = vadd.f32 %v2109, %v2110
        %v2112 = vrot.slane %v2098, 4
        %v2113 = vadd.f32 %v2098, %v2112
        %v2114 = vrot.slane %v2113, 2
        %v2115 = vadd.f32 %v2113, %v2114
        %v2116 = vrot.slane %v2115, 1
        %v2117 = vadd.f32 %v2115, %v2116
        %v2118 = vrot.slane %v2099, 4
        %v2119 = vadd.f32 %v2099, %v2118
        %v2120 = vrot.slane %v2119, 2
        %v2121 = vadd.f32 %v2119, %v2120
        %v2122 = vrot.slane %v2121, 1
        %v2123 = vadd.f32 %v2121, %v2122
        %v2124 = vld [vmem:[%s11] sm:$0xf]
        %v2126 = vperm.slane %v2124, 0
        %v2127 = vperm.slane %v2124, 1
        %v2128 = vperm.slane %v2124, 2
        %v2129 = vperm.slane %v2124, 3
        %v2134 = vmul.f32 %v2105, %v2126
        %v2135 = vmul.f32 %v2111, %v2127
        %v2136 = vmul.f32 %v2117, %v2128
        %v2137 = vmul.f32 %v2123, %v2129
        %vm2138 = vcmask 1040384
        %v2139 = vsel %vm2138, %v2134, 0.0
        %v2140 = vsel %vm2138, %v2135, 0.0
        %v2141 = vadd.f32 %v2139, %v2140
        %v2142 = vsel %vm2138, %v2136, 0.0
        %v2143 = vadd.f32 %v2141, %v2142
        %v2144 = vsel %vm2138, %v2137, 0.0
        %v2145 = vadd.f32 %v2143, %v2144
        %2146 = vadd.xlane.f32.xlu0 %v2145
        %v2147 = vpop.xlane.xlu0 %2146
        %v2148 = vld [vmem:[#allocation3] sm:$0x1]
        %v2149 = vadd.f32 %v2147, %v2148
        %v2150 = vsub.f32 0.0, %v2149
        %v2151 = vmul.f32 %v2150, 1.442695
        %v2152 = vpow.pop %v2151
        %v2153 = vadd.f32 %v2152, 1.0
        %v2154 = vrcp.pop %v2153
        %v2155 = vmul.f32 %v2153, %v2154
        %v2156 = vsub.f32 1.0, %v2155
        %v2157 = vmul.f32 %v2154, %v2156
        %v2158 = vadd.f32 %v2154, %v2157
        %vm2159 = vweird.f32 %v2153
        %vm2160 = vweird.f32 %v2154
        %vm2161 = vmor %vm2159, %vm2160
        %v2162 = vsel %vm2161, %v2154, %v2158
        %v2163 = vand.u32 2147483647, %v2153
        %vm2164 = vcmp.eq.f32.partialorder %v2163, 8.507059e+37
        %v2165 = vand.u32 %v2153, 2147483648
        %v2166 = vor.u32 1.1754944e-38, %v2165
        %v2167 = vsel %vm2164, %v2166, %v2162
        %v2168 = vmul.f32 1.0, %v2167
        %v2169 = vlaneseq
        %v2170 = vshrl.u32 %v2169, 7
        %v2171 = vlaneseq
        %v2172 = vand.u32 %v2171, 127
        %v2173 = vadd.s32 %v2170, 1
        %vm2174 = vcmp.eq.s32.totalorder %v2172, %v2173
        %v2175 = vsel %vm2174, %v2094, 0.0
        %v2176 = vrot.slane %v2175, 4
        %v2177 = vadd.f32 %v2175, %v2176
        %v2178 = vrot.slane %v2177, 2
        %v2179 = vadd.f32 %v2177, %v2178
        %v2180 = vrot.slane %v2179, 1
        %v2181 = vadd.f32 %v2179, %v2180
        %vm2182 = vcmp.eq.s32.totalorder %v2172, 0
        %2184 = vset.pattern.permute.xlu0 0
        %2185 = vperm.xlu0 %2184, %v2168
        %v2186 = vpop.permute.xlu0 %2185
        %v2188 = vsel %vm2182, %v2186, %v2181
        %v2189 = vperm.slane %v2188, 0
        %2190 = vst [vmem:[%s556] sm:$0xff] %v2189
        %p2191 = scmp.lt.s32.totalorder %s34, 2
        %s2192 = scalar_select %p2191, %s34, 2
        %s2193 = smul.addr %s2192, 8
        %s2194 = scalar_lea.vmem %s13, %s2193
        // Predicated region
        $region101: #{attention_mnist_forward.1} parent=71 // pred_check
          %p2195 = pneg %p330
        $region102: #{attention_mnist_forward.1} parent=71 // pred_check_branch
          %2197 = sbr.rel (%p2195) target = $region104
        $region103: #{attention_mnist_forward.1} parent=71 // pred_region
          _
        $region104: #{attention_mnist_forward.1} parent=71 // pred_fallthru
          _
      $region72: #{attention_mnist_forward.1} parent=5 // pred_fallthru
        _
      %p2198 = scmp.le.s32.totalorder 2, %s29
      // Predicated region
      $region105: #{attention_mnist_forward.1} parent=5 // pred_check
        %p2199 = pneg %p2198
      $region106: #{attention_mnist_forward.1} parent=5 // pred_check_branch
        %2201 = sbr.rel (%p2199) target = $region108
      $region107: #{attention_mnist_forward.1} parent=5 // pred_region
        %s2202 = ssub.s32 %s29, 2
        // Predicated region
        $region109: #{attention_mnist_forward.1} parent=107 // pred_check
          %p2203 = pneg %p336
        $region110: #{attention_mnist_forward.1} parent=107 // pred_check_branch
          %2205 = sbr.rel (%p2203) target = $region112
        $region111: #{attention_mnist_forward.1} parent=107 // pred_region
          %p2206 = scmp.lt.s32.totalorder %s35, 2
          %s2207 = scalar_select %p2206, %s35, 2
          %s2208 = smul.addr %s2207, 8
          %s2209 = scalar_lea.vmem %s13, %s2208
        $region112: #{attention_mnist_forward.1} parent=107 // pred_fallthru
          _
      $region108: #{attention_mnist_forward.1} parent=5 // pred_fallthru
        _
    $region6: #{attention_mnist_forward.1} parent=1 // loop_footer
      %s33 = sadd.s32 1, %s29
    $region7: #{attention_mnist_forward.1} parent=1 // loop_footer_branch
      %28 = sbr.rel target = $region3
    $region8: #{attention_mnist_forward.1} parent=1 // loop_exit
      _
    %2210 = vsyncpa [#allocation5], 1
    %s2211 = scalar_lea.sflag [#allocation5], 1
    %2212 = vsyncpa %s2211, 1
    %2213 = vsyncpa [#allocation7], 1
    %2214 = vsyncpa [#allocation10], 1
    %2215 = vsyncpa [#allocation13], 1

</llo_original>
